<compile_context>
chip_gen: v7x
topology: tpu7x:2x2x1
jax: 0.10.0
libtpu: 0.0.40
codegen_flags: <defaults>
</compile_context>

<pallas_src>
import math

import jax
import jax.numpy as jnp
from jax.experimental import pallas as pl
from jax.experimental.pallas import tpu as pltpu

BN_EPS = 1e-5
BN_SCALE = 1.0 / math.sqrt(1.0 + BN_EPS)   # eval-mode BatchNorm with default params
LANE = 128


def _round_up(v, m):
    return ((v + m - 1) // m) * m


def _pad2d(a, rows, cols):
    return jnp.pad(a, ((0, rows - a.shape[0]), (0, cols - a.shape[1])))


# --------------------------------------------------------------------------------------
# Kernel 1: per-edge-tile MLP1.  x[row] is pre-gathered host-side and streamed as a
# normal blocked input (bf16), so this is a pure MXU kernel with auto-pipelined DMAs.
# --------------------------------------------------------------------------------------
def _edge_mlp_kernel(xr_ref,                                    # VMEM (te, node_p) bf16  = x[row] tile
                     ea_ref,                                    # VMEM (te, edge_p) bf16  = edge_attr tile
                     w11x_ref, w11e_ref, b11_ref, w12_ref, b12_ref,
                     h_out_ref):                                # VMEM (te, hid_p) bf16
    # Linear(node+edge -> hidden) as split-weight sum, then BN(eval)+ReLU (+ eval dropout = id)
    h = (jnp.dot(xr_ref[...], w11x_ref[...], preferred_element_type=jnp.float32)
         + jnp.dot(ea_ref[...], w11e_ref[...], preferred_element_type=jnp.float32)
         + b11_ref[...])
    h = jnp.maximum(h * BN_SCALE, 0.0)
    h = (jnp.dot(h.astype(jnp.bfloat16), w12_ref[...], preferred_element_type=jnp.float32)
         + b12_ref[...])
    h_out_ref[...] = h.astype(h_out_ref.dtype)


# --------------------------------------------------------------------------------------
# Kernel 2: scatter_add over edge tiles (exact bf16 one-hot matmul, f32 accumulation)
# followed by MLP2, per node tile.
# --------------------------------------------------------------------------------------
def _node_mlp_kernel(col_ref,                                   # VMEM (1, te) int32
                     h_ref,                                     # VMEM (te, hid_p) bf16
                     x_ref,                                     # VMEM (tn, node_p) bf16
                     w21x_ref, w21h_ref, b21_ref, w22_ref, b22_ref,
                     out_ref,                                   # VMEM (tn, node_p) f32
                     agg_ref):                                  # scratch VMEM (tn, hid_p) f32
    tn = agg_ref.shape[0]
    te = h_ref.shape[0]
    ke = pl.program_id(1)

    @pl.when(ke == 0)
    def _():
        agg_ref[...] = jnp.zeros_like(agg_ref)

    # scatter_add contribution of this edge tile: one-hot (tn, te) bf16 @ h (te, hid) bf16
    node_ids = pl.program_id(0) * tn + jax.lax.broadcasted_iota(jnp.int32, (tn, te), 0)
    onehot = (node_ids == col_ref[...]).astype(jnp.bfloat16)
    agg_ref[...] += jnp.dot(onehot, h_ref[...], preferred_element_type=jnp.float32)

    @pl.when(ke == pl.num_programs(1) - 1)
    def _():
        h2 = (jnp.dot(x_ref[...], w21x_ref[...], preferred_element_type=jnp.float32)
              + jnp.dot(agg_ref[...].astype(jnp.bfloat16), w21h_ref[...],
                        preferred_element_type=jnp.float32)
              + b21_ref[...])
        h2 = jnp.maximum(h2 * BN_SCALE, 0.0)
        out = (jnp.dot(h2.astype(jnp.bfloat16), w22_ref[...], preferred_element_type=jnp.float32)
               + b22_ref[...])
        out_ref[...] = out.astype(out_ref.dtype)


# --------------------------------------------------------------------------------------
# Wrapper
# --------------------------------------------------------------------------------------
def node_model(x, edge_index, edge_attr, params, *, tn=256, te=512):
    """Forward of NodeModel. x:(N,node_dim) f32, edge_index=(row,col) each (E,) int,
    edge_attr:(E,edge_dim) f32. Returns (N, node_dim) f32."""
    row, col = edge_index
    N, node_dim = x.shape
    E, edge_dim = edge_attr.shape
    hidden = params["w12"].shape[0]

    # Clamp tiles for small graphs (keep sublane/lane alignment: tn % 8 == 0, te % 128 == 0).
    te = max(LANE, min(te, _round_up(E, LANE)))
    tn = max(8, min(tn, _round_up(N, 8)))

    node_p = _round_up(node_dim, LANE)
    edge_p = _round_up(edge_dim, LANE)
    hid_p = _round_up(hidden, LANE)
    n_p = _round_up(N, tn)
    e_p = _round_up(E, te)
    n_etiles = e_p // te
    n_ntiles = n_p // tn

    bf = jnp.bfloat16
    # ---- host-side gather of x[row] (XLA) + one-time pad/cast.  Padded edges gather node 0
    #      and are masked out of the scatter via a col sentinel that never matches a node id.
    row_p = jnp.pad(row.astype(jnp.int32), (0, e_p - E))
    xr_p = _pad2d(jnp.take(x, row_p, axis=0), e_p, node_p).astype(bf)       # (e_p, node_p) bf16
    ea_p = _pad2d(edge_attr, e_p, edge_p).astype(bf)                        # (e_p, edge_p) bf16
    x_p = _pad2d(x, n_p, node_p).astype(bf)                                 # (n_p, node_p) bf16
    col_p = jnp.pad(col.astype(jnp.int32), (0, e_p - E), constant_values=n_p)   # sentinel
    col2d = col_p.reshape(1, e_p)

    w11x = _pad2d(params["w11x"], node_p, hid_p).astype(bf)
    w11e = _pad2d(params["w11e"], edge_p, hid_p).astype(bf)
    b11 = _pad2d(params["b11"], 1, hid_p)
    w12 = _pad2d(params["w12"], hid_p, hid_p).astype(bf)
    b12 = _pad2d(params["b12"], 1, hid_p)
    w21x = _pad2d(params["w21x"], node_p, hid_p).astype(bf)
    w21h = _pad2d(params["w21h"], hid_p, hid_p).astype(bf)
    b21 = _pad2d(params["b21"], 1, hid_p)
    w22 = _pad2d(params["w22"], hid_p, node_p).astype(bf)
    b22 = _pad2d(params["b22"], 1, node_p)

    # ---------------- kernel 1: edge MLP ----------------
    edge_cost = pl.CostEstimate(
        flops=2 * e_p * (node_p + edge_p) * hid_p + 2 * e_p * hid_p * hid_p,
        transcendentals=0,
        bytes_accessed=(e_p * (node_p + edge_p + hid_p) * 2
                        + (node_p + edge_p + hid_p) * hid_p * 2 + 3 * hid_p * 4),
    )
    h_edges = pl.pallas_call(
        _edge_mlp_kernel,
        out_shape=jax.ShapeDtypeStruct((e_p, hid_p), jnp.bfloat16),
        grid_spec=pltpu.PrefetchScalarGridSpec(
            num_scalar_prefetch=0,
            grid=(n_etiles,),
            in_specs=[
                pl.BlockSpec((te, node_p), lambda e: (e, 0)),        # x[row] tile (pre-gathered)
                pl.BlockSpec((te, edge_p), lambda e: (e, 0)),        # edge_attr tile
                pl.BlockSpec((node_p, hid_p), lambda e: (0, 0)),     # w11x (resident)
                pl.BlockSpec((edge_p, hid_p), lambda e: (0, 0)),     # w11e
                pl.BlockSpec((1, hid_p), lambda e: (0, 0)),          # b11
                pl.BlockSpec((hid_p, hid_p), lambda e: (0, 0)),      # w12
                pl.BlockSpec((1, hid_p), lambda e: (0, 0)),          # b12
            ],
            out_specs=pl.BlockSpec((te, hid_p), lambda e: (e, 0)),
        ),
        compiler_params=pltpu.CompilerParams(
            dimension_semantics=("parallel",),
            vmem_limit_bytes=48 * 1024 * 1024,
        ),
        cost_estimate=edge_cost,
    )(xr_p, ea_p, w11x, w11e, b11, w12, b12)

    # ---------------- kernel 2: scatter_add + node MLP ----------------
    node_cost = pl.CostEstimate(
        flops=(2 * n_p * e_p * hid_p
               + 2 * n_p * (node_p + hid_p) * hid_p
               + 2 * n_p * hid_p * node_p),
        transcendentals=0,
        bytes_accessed=(n_ntiles * e_p * (hid_p * 2 + 4)            # h_edges + col re-read per node tile
                        + n_p * node_p * 2 + n_p * node_p * 4
                        + (node_p + 2 * hid_p) * hid_p * 2 + hid_p * node_p * 2),
    )
    out_p = pl.pallas_call(
        _node_mlp_kernel,
        out_shape=jax.ShapeDtypeStruct((n_p, node_p), jnp.float32),
        grid_spec=pltpu.PrefetchScalarGridSpec(
            num_scalar_prefetch=0,
            grid=(n_ntiles, n_etiles),
            in_specs=[
                pl.BlockSpec((1, te), lambda ni, ke: (0, ke)),        # col tile
                pl.BlockSpec((te, hid_p), lambda ni, ke: (ke, 0)),    # edge-MLP output tile
                pl.BlockSpec((tn, node_p), lambda ni, ke: (ni, 0)),   # x tile
                pl.BlockSpec((node_p, hid_p), lambda ni, ke: (0, 0)),  # w21x (resident)
                pl.BlockSpec((hid_p, hid_p), lambda ni, ke: (0, 0)),   # w21h
                pl.BlockSpec((1, hid_p), lambda ni, ke: (0, 0)),       # b21
                pl.BlockSpec((hid_p, node_p), lambda ni, ke: (0, 0)),  # w22
                pl.BlockSpec((1, node_p), lambda ni, ke: (0, 0)),      # b22
            ],
            out_specs=pl.BlockSpec((tn, node_p), lambda ni, ke: (ni, 0)),
            scratch_shapes=[pltpu.VMEM((tn, hid_p), jnp.float32)],
        ),
        compiler_params=pltpu.CompilerParams(
            dimension_semantics=("parallel", "arbitrary"),
            vmem_limit_bytes=48 * 1024 * 1024,
        ),
        cost_estimate=node_cost,
    )(col2d, h_edges, x_p, w21x, w21h, b21, w22, b22)

    return out_p[:N, :node_dim]


# --------------------------------------------------------------------------------------
# Parameters / reference
# --------------------------------------------------------------------------------------
def _xavier_uniform(key, fan_in, fan_out):
    bound = math.sqrt(6.0 / (fan_in + fan_out))
    return jax.random.uniform(key, (fan_in, fan_out), jnp.float32, -bound, bound)


def init_params(key, node_dim, edge_dim, hidden_dim):
    """Matches the PyTorch module (num_node_mlp_layers=2):
    node_mlp_1: Linear(node_dim+edge_dim, hidden), Linear(hidden, hidden)
    node_mlp_2: Linear(node_dim+hidden, hidden),   Linear(hidden, node_dim)
    Linear weights xavier_uniform, biases filled with 0.01 (init_weights)."""
    k = jax.random.split(key, 4)
    w1_1 = _xavier_uniform(k[0], node_dim + edge_dim, hidden_dim)
    w1_2 = _xavier_uniform(k[1], hidden_dim, hidden_dim)
    w2_1 = _xavier_uniform(k[2], node_dim + hidden_dim, hidden_dim)
    w2_2 = _xavier_uniform(k[3], hidden_dim, node_dim)
    return {
        # split first-layer weights so cat([a,b],1)@W becomes a@Wa + b@Wb
        "w11x": w1_1[:node_dim], "w11e": w1_1[node_dim:],
        "b11": jnp.full((1, hidden_dim), 0.01, jnp.float32),
        "w12": w1_2, "b12": jnp.full((1, hidden_dim), 0.01, jnp.float32),
        "w21x": w2_1[:node_dim], "w21h": w2_1[node_dim:],
        "b21": jnp.full((1, hidden_dim), 0.01, jnp.float32),
        "w22": w2_2, "b22": jnp.full((1, node_dim), 0.01, jnp.float32),
    }


def reference(x, row, col, edge_attr, params):
    """Pure-JAX reference mirroring the kernel's precision (bf16 MXU operands, f32 accumulate,
    eval-mode BatchNorm/Dropout)."""
    b = lambda a: a.astype(jnp.bfloat16)
    f32 = jnp.float32
    xr = x[row]
    h = (jnp.dot(b(xr), b(params["w11x"]), preferred_element_type=f32)
         + jnp.dot(b(edge_attr), b(params["w11e"]), preferred_element_type=f32)
         + params["b11"])
    h = jnp.maximum(h * BN_SCALE, 0.0)
    h = jnp.dot(b(h), b(params["w12"]), preferred_element_type=f32) + params["b12"]
    h = b(h)                                             # edge-MLP output stored bf16
    agg = jnp.zeros((x.shape[0], h.shape[1]), f32).at[col].add(h.astype(f32))
    h2 = (jnp.dot(b(x), b(params["w21x"]), preferred_element_type=f32)
          + jnp.dot(b(agg), b(params["w21h"]), preferred_element_type=f32)
          + params["b21"])
    h2 = jnp.maximum(h2 * BN_SCALE, 0.0)
    return jnp.dot(b(h2), b(params["w22"]), preferred_element_type=f32) + params["b22"]


if __name__ == "__main__":
    key = jax.random.PRNGKey(0)
    N, E = 300, 1000                       # exercises 2 node tiles x 2 edge tiles at defaults
    node_dim, edge_dim, hidden_dim = 8, 4, 32

    kx, ke, kr, kc, kp = jax.random.split(key, 5)
    x = jax.random.normal(kx, (N, node_dim), jnp.float32)
    edge_attr = jax.random.normal(ke, (E, edge_dim), jnp.float32)
    row = jax.random.randint(kr, (E,), 0, N, jnp.int32)
    col = jax.random.randint(kc, (E,), 0, N, jnp.int32)
    params = init_params(kp, node_dim, edge_dim, hidden_dim)

    out = node_model(x, (row, col), edge_attr, params)
    out = jax.block_until_ready(out)

    ref = reference(x, row, col, edge_attr, params)
    assert out.shape == (N, node_dim)
    assert jnp.allclose(out, ref, atol=3e-3, rtol=3e-3), "mismatch vs pure-JAX reference"
    print("KERNEL_OK")
</pallas_src>

<mosaic_0001>
module attributes {stable_mosaic.version = 11 : i64} {
  func.func @_edge_mlp_kernel(%arg0: i32, %arg1: memref<512x128xbf16, #tpu.memory_space<vmem>>, %arg2: memref<512x128xbf16, #tpu.memory_space<vmem>>, %arg3: memref<128x128xbf16, #tpu.memory_space<vmem>>, %arg4: memref<128x128xbf16, #tpu.memory_space<vmem>>, %arg5: memref<1x128xf32, #tpu.memory_space<vmem>>, %arg6: memref<128x128xbf16, #tpu.memory_space<vmem>>, %arg7: memref<1x128xf32, #tpu.memory_space<vmem>>, %arg8: memref<512x128xbf16, #tpu.memory_space<vmem>>) attributes {dimension_semantics = [#tpu.dimension_semantics<parallel>], iteration_bounds = array<i64: 2>, scalar_prefetch = 0 : i64, scratch_operands = 0 : i64, tpu.core_type = #tpu.core_type<tc>, window_params = [{transform_indices = @transform_0, window_bounds = array<i64: 512, 128>}, {transform_indices = @transform_1, window_bounds = array<i64: 512, 128>}, {pipeline_mode = #tpu.pipeline_mode<synchronous>, transform_indices = @transform_2, window_bounds = array<i64: 128, 128>}, {pipeline_mode = #tpu.pipeline_mode<synchronous>, transform_indices = @transform_3, window_bounds = array<i64: 128, 128>}, {pipeline_mode = #tpu.pipeline_mode<synchronous>, transform_indices = @transform_4, window_bounds = array<i64: 1, 128>}, {pipeline_mode = #tpu.pipeline_mode<synchronous>, transform_indices = @transform_5, window_bounds = array<i64: 128, 128>}, {pipeline_mode = #tpu.pipeline_mode<synchronous>, transform_indices = @transform_6, window_bounds = array<i64: 1, 128>}, {transform_indices = @transform_7, window_bounds = array<i64: 512, 128>}]} {
    %c0 = arith.constant 0 : index
    %c0_0 = arith.constant 0 : index
    %0 = vector.load %arg1[%c0, %c0_0] : memref<512x128xbf16, #tpu.memory_space<vmem>>, vector<512x128xbf16>
    %c0_1 = arith.constant 0 : index
    %c0_2 = arith.constant 0 : index
    %1 = vector.load %arg3[%c0_1, %c0_2] : memref<128x128xbf16, #tpu.memory_space<vmem>>, vector<128x128xbf16>
    %cst = arith.constant dense<0.000000e+00> : vector<512x128xf32>
    %2 = tpu.matmul %0, %1, %cst {dimension_numbers = #tpu.dot_dimension_numbers<[1], [0], [0], [1], [0, 0, 1, 1], [], []>} : vector<512x128xbf16>, vector<128x128xbf16>, vector<512x128xf32> -> vector<512x128xf32>
    %c0_3 = arith.constant 0 : index
    %c0_4 = arith.constant 0 : index
    %3 = vector.load %arg2[%c0_3, %c0_4] : memref<512x128xbf16, #tpu.memory_space<vmem>>, vector<512x128xbf16>
    %c0_5 = arith.constant 0 : index
    %c0_6 = arith.constant 0 : index
    %4 = vector.load %arg4[%c0_5, %c0_6] : memref<128x128xbf16, #tpu.memory_space<vmem>>, vector<128x128xbf16>
    %cst_7 = arith.constant dense<0.000000e+00> : vector<512x128xf32>
    %5 = tpu.matmul %3, %4, %cst_7 {dimension_numbers = #tpu.dot_dimension_numbers<[1], [0], [0], [1], [0, 0, 1, 1], [], []>} : vector<512x128xbf16>, vector<128x128xbf16>, vector<512x128xf32> -> vector<512x128xf32>
    %6 = arith.addf %2, %5 : vector<512x128xf32>
    %c0_8 = arith.constant 0 : index
    %c0_9 = arith.constant 0 : index
    %7 = vector.load %arg5[%c0_8, %c0_9] : memref<1x128xf32, #tpu.memory_space<vmem>>, vector<1x128xf32>
    %8 = vector.broadcast %7 : vector<1x128xf32> to vector<512x128xf32>
    %9 = arith.addf %6, %8 : vector<512x128xf32>
    %cst_10 = arith.constant 0.999994993 : f32
    %10 = vector.broadcast %cst_10 : f32 to vector<512x128xf32>
    %11 = arith.mulf %9, %10 : vector<512x128xf32>
    %cst_11 = arith.constant 0.000000e+00 : f32
    %12 = vector.broadcast %cst_11 : f32 to vector<512x128xf32>
    %13 = arith.maximumf %11, %12 : vector<512x128xf32>
    %14 = arith.truncf %13 : vector<512x128xf32> to vector<512x128xbf16>
    %c0_12 = arith.constant 0 : index
    %c0_13 = arith.constant 0 : index
    %15 = vector.load %arg6[%c0_12, %c0_13] : memref<128x128xbf16, #tpu.memory_space<vmem>>, vector<128x128xbf16>
    %cst_14 = arith.constant dense<0.000000e+00> : vector<512x128xf32>
    %16 = tpu.matmul %14, %15, %cst_14 {dimension_numbers = #tpu.dot_dimension_numbers<[1], [0], [0], [1], [0, 0, 1, 1], [], []>} : vector<512x128xbf16>, vector<128x128xbf16>, vector<512x128xf32> -> vector<512x128xf32>
    %c0_15 = arith.constant 0 : index
    %c0_16 = arith.constant 0 : index
    %17 = vector.load %arg7[%c0_15, %c0_16] : memref<1x128xf32, #tpu.memory_space<vmem>>, vector<1x128xf32>
    %18 = vector.broadcast %17 : vector<1x128xf32> to vector<512x128xf32>
    %19 = arith.addf %16, %18 : vector<512x128xf32>
    %20 = arith.truncf %19 : vector<512x128xf32> to vector<512x128xbf16>
    %c0_17 = arith.constant 0 : index
    %c0_18 = arith.constant 0 : index
    %21 = vector.load %arg8[%c0_17, %c0_18] : memref<512x128xbf16, #tpu.memory_space<vmem>>, vector<512x128xbf16>
    tpu.vector_store %arg8[%c0_17, %c0_18], %20 {strides = array<i32>} : memref<512x128xbf16, #tpu.memory_space<vmem>>, vector<512x128xbf16>,
    return
  }
  func.func @transform_0(%arg0: i32) -> (i32, i32) {
    %c0_i32 = arith.constant 0 : i32
    %c0_i32_0 = arith.constant 0 : i32
    return %arg0, %c0_i32 : i32, i32
  }
  func.func @transform_1(%arg0: i32) -> (i32, i32) {
    %c0_i32 = arith.constant 0 : i32
    %c0_i32_0 = arith.constant 0 : i32
    return %arg0, %c0_i32 : i32, i32
  }
  func.func @transform_2(%arg0: i32) -> (i32, i32) {
    %c0_i32 = arith.constant 0 : i32
    %c0_i32_0 = arith.constant 0 : i32
    %c0_i32_1 = arith.constant 0 : i32
    return %c0_i32, %c0_i32_0 : i32, i32
  }
  func.func @transform_3(%arg0: i32) -> (i32, i32) {
    %c0_i32 = arith.constant 0 : i32
    %c0_i32_0 = arith.constant 0 : i32
    %c0_i32_1 = arith.constant 0 : i32
    return %c0_i32, %c0_i32_0 : i32, i32
  }
  func.func @transform_4(%arg0: i32) -> (i32, i32) {
    %c0_i32 = arith.constant 0 : i32
    %c0_i32_0 = arith.constant 0 : i32
    %c0_i32_1 = arith.constant 0 : i32
    return %c0_i32, %c0_i32_0 : i32, i32
  }
  func.func @transform_5(%arg0: i32) -> (i32, i32) {
    %c0_i32 = arith.constant 0 : i32
    %c0_i32_0 = arith.constant 0 : i32
    %c0_i32_1 = arith.constant 0 : i32
    return %c0_i32, %c0_i32_0 : i32, i32
  }
  func.func @transform_6(%arg0: i32) -> (i32, i32) {
    %c0_i32 = arith.constant 0 : i32
    %c0_i32_0 = arith.constant 0 : i32
    %c0_i32_1 = arith.constant 0 : i32
    return %c0_i32, %c0_i32_0 : i32, i32
  }
  func.func @transform_7(%arg0: i32) -> (i32, i32) {
    %c0_i32 = arith.constant 0 : i32
    %c0_i32_0 = arith.constant 0 : i32
    return %arg0, %c0_i32 : i32, i32
  }
}

</mosaic_0001>

<llo_original>
// kernel: tpu_custom_call.1
$region0: #{tpu_custom_call.1}
  #allocation0 [shape = 'u32[]', space=smem, size = 0x4, offset = 0x4, fixed_abs, tag = 'smem constant byte address 0x4 - core index']
  #allocation1 [shape = 'u32[144,128]{1,0:T(1,128)}', space=vmem, size = 0x12000, scoped, tag = 'internal scratch']
  %s0 = inlined_call_operand.hbm [shape: bf16[1024,128], index: 0, kind: input, shape index: {}]
  %s1 = inlined_call_operand.hbm [shape: bf16[1024,128], index: 1, kind: input, shape index: {}]
  %s2 = inlined_call_operand.hbm [shape: bf16[128,128], index: 2, kind: input, shape index: {}]
  %s3 = inlined_call_operand.hbm [shape: bf16[128,128], index: 3, kind: input, shape index: {}]
  %s4 = inlined_call_operand.vmem [shape: f32[1,128], index: 4, kind: input, shape index: {}]
  %s5 = inlined_call_operand.hbm [shape: bf16[128,128], index: 5, kind: input, shape index: {}]
  %s6 = inlined_call_operand.vmem [shape: f32[1,128], index: 6, kind: input, shape index: {}]
  %s7 = inlined_call_operand.hbm [shape: bf16[1024,128], index: 7, kind: output, shape index: {}]
  %s8 = sld [smem:[#allocation0]]
  $region81: #{tpu_custom_call.1} parent=0
    _
  %s10 = ssub.s32 1, %s8
  %s11 = scalar_select 0, %s10, %s8
  $region1: #{tpu_custom_call.1} parent=0
    #allocation2 [shape = 'u8[262144]{0}', space=vmem, size = 0x40000, scoped, tag = 'input window, operand 0']
    #allocation3 [shape = 's32[2]{0}', space=sflag, size = 0x8, scoped, tag = 'scoped memory for tpu_custom_call.1']
    #allocation4 [shape = 's32[2]{0}', space=sflag, size = 0x8, scoped, tag = 'scoped memory for tpu_custom_call.1']
    #allocation5 [shape = 'u8[262144]{0}', space=vmem, size = 0x40000, scoped, tag = 'input window, operand 1']
    #allocation6 [shape = 's32[2]{0}', space=sflag, size = 0x8, scoped, tag = 'scoped memory for tpu_custom_call.1']
    #allocation7 [shape = 'u8[32768]{0}', space=vmem, size = 0x8000, scoped, tag = 'input window, operand 2, single buffered']
    #allocation8 [shape = 'u8[32768]{0}', space=vmem, size = 0x8000, scoped, tag = 'input window, operand 3, single buffered']
    #allocation9 [shape = 's32[1]{0}', space=sflag, size = 0x4, scoped, tag = 'scoped memory for tpu_custom_call.1']
    #allocation10 [shape = 'u8[32768]{0}', space=vmem, size = 0x8000, scoped, tag = 'input window, operand 5, single buffered']
    #allocation11 [shape = 'u8[262144]{0}', space=vmem, size = 0x40000, scoped, tag = 'output window, operand 0']
    %12 = vsyncpa [#allocation3], 0
    %s13 = scalar_lea.sflag [#allocation3], 1
    %14 = vsyncpa %s13, 0
    %15 = vsyncpa [#allocation6], 0
    %s16 = scalar_lea.sflag [#allocation6], 1
    %17 = vsyncpa %s16, 0
    %18 = vsyncpa [#allocation9], 0
    %19 = vsyncpa [#allocation4], 0
    %s20 = scalar_lea.sflag [#allocation4], 1
    %21 = vsyncpa %s20, 0
    loop: start=0, step=1, limit=4
    $region2: #{tpu_custom_call.1} parent=1 // loop_pre_header
      _
    $region3: #{tpu_custom_call.1} parent=1 // loop_header
      %s23 = sphi 0, %s27
      %p24 = scmp.ge.s32.totalorder %s23, 4
      %s33 = sphi 0, %s35
      %s36 = sphi 0, %s33
      %s37 = sphi 0, %s36
      %s53 = sphi 0, %s37
      %s59 = sphi 0, %s61
      %s62 = sphi 0, %s59
      %s63 = sphi 0, %s62
      %s79 = sphi 0, %s63
      %s83 = sphi 0, %s83
      %s85 = sphi 0, %s83
      %s86 = sphi 0, %s85
      %s100 = sphi 0, %s86
      %s104 = sphi 0, %s104
      %s106 = sphi 0, %s104
      %s107 = sphi 0, %s106
      %s121 = sphi 0, %s107
      %s125 = sphi 0, %s125
      %s127 = sphi 0, %s125
      %s128 = sphi 0, %s127
      %s142 = sphi 0, %s128
      %s146 = sphi 0, %s146
      %s148 = sphi 0, %s146
      %s149 = sphi 0, %s148
      %s163 = sphi 0, %s149
      %s167 = sphi 0, %s167
      %s169 = sphi 0, %s167
      %s170 = sphi 0, %s169
      %s184 = sphi 0, %s170
      %s190 = sphi 0, %s192
      %s193 = sphi 0, %s190
      %s194 = sphi 0, %s193
      %s210 = sphi 0, %s194
    $region4: #{tpu_custom_call.1} parent=1 // loop_header_branch
      %26 = sbr.rel (%p24) target = $region8
    $region5: #{tpu_custom_call.1} parent=1 // loop_body
      %s28 = ssub.s32 %s23, 1
      %s29 = ssub.s32 %s23, 2
      %s30 = sadd.s32 %s23, 1
      %s31 = ssub.s32 %s23, %s30
      %p32 = scmp.eq.s32.totalorder %s31, 0
      %s34 = sadd.s32 %s33, 1
      %s35 = scalar_select %p32, %s33, %s34
      %p38 = pneg %p32
      %p39 = scmp.eq.s32.totalorder %s23, 1
      %p40 = por %p38, %p39
      %p41 = scmp.ne.s32.totalorder %s33, %s36
      %p42 = scmp.eq.s32.totalorder %s23, 0
      %p43 = por %p41, %p42
      %p44 = scmp.ne.s32.totalorder %s33, %s36
      %p45 = scmp.eq.s32.totalorder %s28, 1
      %p46 = por %p44, %p45
      %p47 = scmp.ne.s32.totalorder %s36, %s37
      %p48 = scmp.eq.s32.totalorder %s28, 0
      %p49 = por %p47, %p48
      %p50 = scmp.ne.s32.totalorder %s36, %s37
      %p51 = scmp.eq.s32.totalorder %s29, 1
      %p52 = por %p50, %p51
      %p54 = scmp.ne.s32.totalorder %s37, %s53
      %p55 = scmp.eq.s32.totalorder %s29, 0
      %p56 = por %p54, %p55
      %s57 = ssub.s32 %s23, %s30
      %p58 = scmp.eq.s32.totalorder %s57, 0
      %s60 = sadd.s32 %s59, 1
      %s61 = scalar_select %p58, %s59, %s60
      %p64 = pneg %p58
      %p65 = scmp.eq.s32.totalorder %s23, 1
      %p66 = por %p64, %p65
      %p67 = scmp.ne.s32.totalorder %s59, %s62
      %p68 = scmp.eq.s32.totalorder %s23, 0
      %p69 = por %p67, %p68
      %p70 = scmp.ne.s32.totalorder %s59, %s62
      %p71 = scmp.eq.s32.totalorder %s28, 1
      %p72 = por %p70, %p71
      %p73 = scmp.ne.s32.totalorder %s62, %s63
      %p74 = scmp.eq.s32.totalorder %s28, 0
      %p75 = por %p73, %p74
      %p76 = scmp.ne.s32.totalorder %s62, %s63
      %p77 = scmp.eq.s32.totalorder %s29, 1
      %p78 = por %p76, %p77
      %p80 = scmp.ne.s32.totalorder %s63, %s79
      %p81 = scmp.eq.s32.totalorder %s29, 0
      %p82 = por %p80, %p81
      %s84 = sadd.s32 %s83, 1
      %p87 = scmp.eq.s32.totalorder %s23, 1
      %p88 = scmp.ne.s32.totalorder %s83, %s85
      %p89 = scmp.eq.s32.totalorder %s23, 0
      %p90 = por %p88, %p89
      %p91 = scmp.ne.s32.totalorder %s83, %s85
      %p92 = scmp.eq.s32.totalorder %s28, 1
      %p93 = por %p91, %p92
      %p94 = scmp.ne.s32.totalorder %s85, %s86
      %p95 = scmp.eq.s32.totalorder %s28, 0
      %p96 = por %p94, %p95
      %p97 = scmp.ne.s32.totalorder %s85, %s86
      %p98 = scmp.eq.s32.totalorder %s29, 1
      %p99 = por %p97, %p98
      %p101 = scmp.ne.s32.totalorder %s86, %s100
      %p102 = scmp.eq.s32.totalorder %s29, 0
      %p103 = por %p101, %p102
      %s105 = sadd.s32 %s104, 1
      %p108 = scmp.eq.s32.totalorder %s23, 1
      %p109 = scmp.ne.s32.totalorder %s104, %s106
      %p110 = scmp.eq.s32.totalorder %s23, 0
      %p111 = por %p109, %p110
      %p112 = scmp.ne.s32.totalorder %s104, %s106
      %p113 = scmp.eq.s32.totalorder %s28, 1
      %p114 = por %p112, %p113
      %p115 = scmp.ne.s32.totalorder %s106, %s107
      %p116 = scmp.eq.s32.totalorder %s28, 0
      %p117 = por %p115, %p116
      %p118 = scmp.ne.s32.totalorder %s106, %s107
      %p119 = scmp.eq.s32.totalorder %s29, 1
      %p120 = por %p118, %p119
      %p122 = scmp.ne.s32.totalorder %s107, %s121
      %p123 = scmp.eq.s32.totalorder %s29, 0
      %p124 = por %p122, %p123
      %s126 = sadd.s32 %s125, 1
      %p129 = scmp.eq.s32.totalorder %s23, 1
      %p130 = scmp.ne.s32.totalorder %s125, %s127
      %p131 = scmp.eq.s32.totalorder %s23, 0
      %p132 = por %p130, %p131
      %p133 = scmp.ne.s32.totalorder %s125, %s127
      %p134 = scmp.eq.s32.totalorder %s28, 1
      %p135 = por %p133, %p134
      %p136 = scmp.ne.s32.totalorder %s127, %s128
      %p137 = scmp.eq.s32.totalorder %s28, 0
      %p138 = por %p136, %p137
      %p139 = scmp.ne.s32.totalorder %s127, %s128
      %p140 = scmp.eq.s32.totalorder %s29, 1
      %p141 = por %p139, %p140
      %p143 = scmp.ne.s32.totalorder %s128, %s142
      %p144 = scmp.eq.s32.totalorder %s29, 0
      %p145 = por %p143, %p144
      %s147 = sadd.s32 %s146, 1
      %p150 = scmp.eq.s32.totalorder %s23, 1
      %p151 = scmp.ne.s32.totalorder %s146, %s148
      %p152 = scmp.eq.s32.totalorder %s23, 0
      %p153 = por %p151, %p152
      %p154 = scmp.ne.s32.totalorder %s146, %s148
      %p155 = scmp.eq.s32.totalorder %s28, 1
      %p156 = por %p154, %p155
      %p157 = scmp.ne.s32.totalorder %s148, %s149
      %p158 = scmp.eq.s32.totalorder %s28, 0
      %p159 = por %p157, %p158
      %p160 = scmp.ne.s32.totalorder %s148, %s149
      %p161 = scmp.eq.s32.totalorder %s29, 1
      %p162 = por %p160, %p161
      %p164 = scmp.ne.s32.totalorder %s149, %s163
      %p165 = scmp.eq.s32.totalorder %s29, 0
      %p166 = por %p164, %p165
      %s168 = sadd.s32 %s167, 1
      %p171 = scmp.eq.s32.totalorder %s23, 1
      %p172 = scmp.ne.s32.totalorder %s167, %s169
      %p173 = scmp.eq.s32.totalorder %s23, 0
      %p174 = por %p172, %p173
      %p175 = scmp.ne.s32.totalorder %s167, %s169
      %p176 = scmp.eq.s32.totalorder %s28, 1
      %p177 = por %p175, %p176
      %p178 = scmp.ne.s32.totalorder %s169, %s170
      %p179 = scmp.eq.s32.totalorder %s28, 0
      %p180 = por %p178, %p179
      %p181 = scmp.ne.s32.totalorder %s169, %s170
      %p182 = scmp.eq.s32.totalorder %s29, 1
      %p183 = por %p181, %p182
      %p185 = scmp.ne.s32.totalorder %s170, %s184
      %p186 = scmp.eq.s32.totalorder %s29, 0
      %p187 = por %p185, %p186
      %s188 = ssub.s32 %s23, %s30
      %p189 = scmp.eq.s32.totalorder %s188, 0
      %s191 = sadd.s32 %s190, 1
      %s192 = scalar_select %p189, %s190, %s191
      %p195 = pneg %p189
      %p196 = scmp.eq.s32.totalorder %s23, 1
      %p197 = por %p195, %p196
      %p198 = scmp.ne.s32.totalorder %s190, %s193
      %p199 = scmp.eq.s32.totalorder %s23, 0
      %p200 = por %p198, %p199
      %p201 = scmp.ne.s32.totalorder %s190, %s193
      %p202 = scmp.eq.s32.totalorder %s28, 1
      %p203 = por %p201, %p202
      %p204 = scmp.ne.s32.totalorder %s193, %s194
      %p205 = scmp.eq.s32.totalorder %s28, 0
      %p206 = por %p204, %p205
      %p207 = scmp.ne.s32.totalorder %s193, %s194
      %p208 = scmp.eq.s32.totalorder %s29, 1
      %p209 = por %p207, %p208
      %p211 = scmp.ne.s32.totalorder %s194, %s210
      %p212 = scmp.eq.s32.totalorder %s29, 0
      %p213 = por %p211, %p212
      %p214 = scmp.le.s32.totalorder 1, %s23
      %p215 = scmp.lt.s32.totalorder %s23, 3
      %p216 = pnand %p214, %p215
      %p217 = pneg %p216
      // Predicated region
      $region9: #{tpu_custom_call.1} parent=5 // pred_check
        _
      $region10: #{tpu_custom_call.1} parent=5 // pred_check_branch
        %219 = sbr.rel (%p216) target = $region12
      $region11: #{tpu_custom_call.1} parent=5 // pred_region
        %s220 = ssub.s32 %s23, 1
        // Predicated region
        $region13: #{tpu_custom_call.1} parent=11 // pred_check
          %p221 = pneg %p96
        $region14: #{tpu_custom_call.1} parent=11 // pred_check_branch
          %223 = sbr.rel (%p221) target = $region16
        $region15: #{tpu_custom_call.1} parent=11 // pred_region
          %s225 = ssub.s32 1024, 1024
          %226 = vsyncadd [#allocation6], %s225
          %s227 = sshll.u32 [#allocation7], 4
          %s228 = int_to_ptr.vmem [resolvable:$true] %s227
          %233 = dma.hbm_to_vmem [thread:$0]  %s2, 1024, %s228, [#allocation6], 64, 64, 4
        $region16: #{tpu_custom_call.1} parent=11 // pred_fallthru
          _
        // Predicated region
        $region17: #{tpu_custom_call.1} parent=11 // pred_check
          %p234 = pneg %p117
        $region18: #{tpu_custom_call.1} parent=11 // pred_check_branch
          %236 = sbr.rel (%p234) target = $region20
        $region19: #{tpu_custom_call.1} parent=11 // pred_region
          %s238 = ssub.s32 1024, 1024
          %239 = vsyncadd [#allocation9], %s238
          %s240 = sshll.u32 [#allocation8], 4
          %s241 = int_to_ptr.vmem [resolvable:$true] %s240
          %246 = dma.hbm_to_vmem [thread:$0]  %s3, 1024, %s241, [#allocation9], 64, 64, 4
        $region20: #{tpu_custom_call.1} parent=11 // pred_fallthru
          _
        // Predicated region
        $region21: #{tpu_custom_call.1} parent=11 // pred_check
          %p247 = pneg %p138
        $region22: #{tpu_custom_call.1} parent=11 // pred_check_branch
          %249 = sbr.rel (%p247) target = $region24
        $region23: #{tpu_custom_call.1} parent=11 // pred_region
          _
        $region24: #{tpu_custom_call.1} parent=11 // pred_fallthru
          _
        // Predicated region
        $region25: #{tpu_custom_call.1} parent=11 // pred_check
          %p250 = pneg %p159
        $region26: #{tpu_custom_call.1} parent=11 // pred_check_branch
          %252 = sbr.rel (%p250) target = $region28
        $region27: #{tpu_custom_call.1} parent=11 // pred_region
          %s254 = ssub.s32 1024, 1024
          %255 = vsyncadd [#allocation9], %s254
          %s256 = sshll.u32 [#allocation10], 4
          %s257 = int_to_ptr.vmem [resolvable:$true] %s256
          %262 = dma.hbm_to_vmem [thread:$0]  %s5, 1024, %s257, [#allocation9], 64, 64, 4
        $region28: #{tpu_custom_call.1} parent=11 // pred_fallthru
          _
        // Predicated region
        $region29: #{tpu_custom_call.1} parent=11 // pred_check
          %p263 = pneg %p180
        $region30: #{tpu_custom_call.1} parent=11 // pred_check_branch
          %265 = sbr.rel (%p263) target = $region32
        $region31: #{tpu_custom_call.1} parent=11 // pred_region
          _
        $region32: #{tpu_custom_call.1} parent=11 // pred_fallthru
          _
      $region12: #{tpu_custom_call.1} parent=5 // pred_fallthru
        _
      %p266 = scmp.lt.s32.totalorder %s23, 2
      // Predicated region
      $region33: #{tpu_custom_call.1} parent=5 // pred_check
        %p267 = pneg %p266
      $region34: #{tpu_custom_call.1} parent=5 // pred_check_branch
        %269 = sbr.rel (%p267) target = $region36
      $region35: #{tpu_custom_call.1} parent=5 // pred_region
        // Predicated region
        $region37: #{tpu_custom_call.1} parent=35 // pred_check
          %p270 = pneg %p43
        $region38: #{tpu_custom_call.1} parent=35 // pred_check_branch
          %272 = sbr.rel (%p270) target = $region40
        $region39: #{tpu_custom_call.1} parent=35 // pred_region
          %s273 = sand.u32 %s33, 1
          %s274 = scalar_lea.sflag [#allocation3], %s273
          %s275 = sand.u32 %s33, 1
          %s276 = smul.addr %s275, 256
          %s277 = scalar_lea.vmem [#allocation2], %s276
          %s278 = smul.u32 64, %s23
          %s280 = ssub.s32 4096, 4096
          %281 = vsyncadd %s274, %s280
          %s282 = smul.addr %s278, 64
          %s283 = scalar_lea.hbm %s0, %s282
          %s284 = sshll.u32 %s277, 4
          %s285 = int_to_ptr.vmem [resolvable:$true] %s284
          %290 = dma.hbm_to_vmem [thread:$0]  %s283, 4096, %s285, %s274, 64, 64, 4
        $region40: #{tpu_custom_call.1} parent=35 // pred_fallthru
          _
        // Predicated region
        $region41: #{tpu_custom_call.1} parent=35 // pred_check
          %p291 = pneg %p69
        $region42: #{tpu_custom_call.1} parent=35 // pred_check_branch
          %293 = sbr.rel (%p291) target = $region44
        $region43: #{tpu_custom_call.1} parent=35 // pred_region
          %s294 = sand.u32 %s23, 1
          %s295 = scalar_lea.sflag [#allocation6], %s294
          %s296 = sand.u32 %s59, 1
          %s297 = smul.addr %s296, 256
          %s298 = scalar_lea.vmem [#allocation5], %s297
          %s299 = smul.u32 64, %s23
          %s301 = ssub.s32 4096, 4096
          %302 = vsyncadd %s295, %s301
          %s303 = smul.addr %s299, 64
          %s304 = scalar_lea.hbm %s1, %s303
          %s305 = sshll.u32 %s298, 4
          %s306 = int_to_ptr.vmem [resolvable:$true] %s305
          %311 = dma.hbm_to_vmem [thread:$0]  %s304, 4096, %s306, %s295, 64, 64, 4
        $region44: #{tpu_custom_call.1} parent=35 // pred_fallthru
          _
      $region36: #{tpu_custom_call.1} parent=5 // pred_fallthru
        _
      %p312 = scmp.le.s32.totalorder 1, %s23
      %p313 = scmp.lt.s32.totalorder %s23, 3
      %p314 = pnand %p312, %p313
      %p315 = pneg %p314
      // Predicated region
      $region45: #{tpu_custom_call.1} parent=5 // pred_check
        _
      $region46: #{tpu_custom_call.1} parent=5 // pred_check_branch
        %317 = sbr.rel (%p314) target = $region48
      $region47: #{tpu_custom_call.1} parent=5 // pred_region
        %s318 = ssub.s32 %s23, 1
        %s319 = sand.u32 %s36, 1
        %s320 = scalar_lea.sflag [#allocation3], %s319
        %s321 = sand.u32 %s36, 1
        %s322 = smul.addr %s321, 256
        %s323 = scalar_lea.vmem [#allocation2], %s322
        // Predicated region
        $region49: #{tpu_custom_call.1} parent=47 // pred_check
          %p324 = pneg %p49
        $region50: #{tpu_custom_call.1} parent=47 // pred_check_branch
          %326 = sbr.rel (%p324) target = $region52
        $region51: #{tpu_custom_call.1} parent=47 // pred_region
          %327 = dma.done %s320, 4096
        $region52: #{tpu_custom_call.1} parent=47 // pred_fallthru
          _
        %s328 = sand.u32 %s28, 1
        %s329 = scalar_lea.sflag [#allocation6], %s328
        %s330 = sand.u32 %s62, 1
        %s331 = smul.addr %s330, 256
        %s332 = scalar_lea.vmem [#allocation5], %s331
        // Predicated region
        $region53: #{tpu_custom_call.1} parent=47 // pred_check
          %p333 = pneg %p75
        $region54: #{tpu_custom_call.1} parent=47 // pred_check_branch
          %335 = sbr.rel (%p333) target = $region56
        $region55: #{tpu_custom_call.1} parent=47 // pred_region
          %336 = dma.done %s329, 4096
        $region56: #{tpu_custom_call.1} parent=47 // pred_fallthru
          _
        // Predicated region
        $region57: #{tpu_custom_call.1} parent=47 // pred_check
          %p337 = pneg %p96
        $region58: #{tpu_custom_call.1} parent=47 // pred_check_branch
          %339 = sbr.rel (%p337) target = $region60
        $region59: #{tpu_custom_call.1} parent=47 // pred_region
          %340 = dma.done [#allocation6], 1024
        $region60: #{tpu_custom_call.1} parent=47 // pred_fallthru
          _
        // Predicated region
        $region61: #{tpu_custom_call.1} parent=47 // pred_check
          %p341 = pneg %p117
        $region62: #{tpu_custom_call.1} parent=47 // pred_check_branch
          %343 = sbr.rel (%p341) target = $region64
        $region63: #{tpu_custom_call.1} parent=47 // pred_region
          %344 = dma.done [#allocation9], 1024
        $region64: #{tpu_custom_call.1} parent=47 // pred_fallthru
          _
        // Predicated region
        $region65: #{tpu_custom_call.1} parent=47 // pred_check
          %p345 = pneg %p159
        $region66: #{tpu_custom_call.1} parent=47 // pred_check_branch
          %347 = sbr.rel (%p345) target = $region68
        $region67: #{tpu_custom_call.1} parent=47 // pred_region
          %348 = dma.done [#allocation9], 1024
        $region68: #{tpu_custom_call.1} parent=47 // pred_fallthru
          _
        %s349 = sand.u32 %s36, 1
        %s350 = scalar_lea.sflag [#allocation3], %s349
        %s351 = sand.u32 %s36, 1
        %s352 = smul.addr %s351, 256
        %s353 = scalar_lea.vmem [#allocation2], %s352
        %p354 = pneg %p49
        %p355 = pneg %p46
        %s356 = sand.u32 %s28, 1
        %s357 = scalar_lea.sflag [#allocation6], %s356
        %s358 = sand.u32 %s62, 1
        %s359 = smul.addr %s358, 256
        %s360 = scalar_lea.vmem [#allocation5], %s359
        %p361 = pneg %p75
        %p362 = pneg %p72
        %p363 = pneg %p96
        %p364 = pneg %p93
        %p365 = pneg %p117
        %p366 = pneg %p114
        %p367 = pneg %p138
        %p368 = pneg %p135
        %p369 = pneg %p159
        %p370 = pneg %p156
        %p371 = pneg %p180
        %p372 = pneg %p177
        %p373 = pneg %p206
        %p374 = pneg %p203
        %s375 = sand.u32 %s193, 1
        %s376 = scalar_lea.sflag [#allocation4], %s375
        %s377 = sand.u32 %s193, 1
        %s378 = smul.addr %s377, 256
        %s379 = scalar_lea.vmem [#allocation11], %s378
        %s380 = smul.u32 64, %s28
        %s381 = smul.u32 64, %s28
        %s382 = smul.u32 64, %s28
        %v384 = vld [vmem:[%s323] sm:$0xf]
        %v385 = vld [vmem:[%s323 + $0x4] sm:$0xf]
        %v386 = vld [vmem:[%s323 + $0x8] sm:$0xf]
        %v387 = vld [vmem:[%s323 + $0xc] sm:$0xf]
        %v388 = vld [vmem:[%s323 + $0x10] sm:$0xf]
        %v389 = vld [vmem:[%s323 + $0x14] sm:$0xf]
        %v390 = vld [vmem:[%s323 + $0x18] sm:$0xf]
        %v391 = vld [vmem:[%s323 + $0x1c] sm:$0xf]
        %v392 = vld [vmem:[%s323 + $0x20] sm:$0xf]
        %v393 = vld [vmem:[%s323 + $0x24] sm:$0xf]
        %v394 = vld [vmem:[%s323 + $0x28] sm:$0xf]
        %v395 = vld [vmem:[%s323 + $0x2c] sm:$0xf]
        %v396 = vld [vmem:[%s323 + $0x30] sm:$0xf]
        %v397 = vld [vmem:[%s323 + $0x34] sm:$0xf]
        %v398 = vld [vmem:[%s323 + $0x38] sm:$0xf]
        %v399 = vld [vmem:[%s323 + $0x3c] sm:$0xf]
        %v400 = vld [vmem:[%s323 + $0x40] sm:$0xf]
        %v401 = vld [vmem:[%s323 + $0x44] sm:$0xf]
        %v402 = vld [vmem:[%s323 + $0x48] sm:$0xf]
        %v403 = vld [vmem:[%s323 + $0x4c] sm:$0xf]
        %v404 = vld [vmem:[%s323 + $0x50] sm:$0xf]
        %v405 = vld [vmem:[%s323 + $0x54] sm:$0xf]
        %v406 = vld [vmem:[%s323 + $0x58] sm:$0xf]
        %v407 = vld [vmem:[%s323 + $0x5c] sm:$0xf]
        %v408 = vld [vmem:[%s323 + $0x60] sm:$0xf]
        %v409 = vld [vmem:[%s323 + $0x64] sm:$0xf]
        %v410 = vld [vmem:[%s323 + $0x68] sm:$0xf]
        %v411 = vld [vmem:[%s323 + $0x6c] sm:$0xf]
        %v412 = vld [vmem:[%s323 + $0x70] sm:$0xf]
        %v413 = vld [vmem:[%s323 + $0x74] sm:$0xf]
        %v414 = vld [vmem:[%s323 + $0x78] sm:$0xf]
        %v415 = vld [vmem:[%s323 + $0x7c] sm:$0xf]
        %v416 = vld [vmem:[%s323 + $0x80] sm:$0xf]
        %v417 = vld [vmem:[%s323 + $0x84] sm:$0xf]
        %v418 = vld [vmem:[%s323 + $0x88] sm:$0xf]
        %v419 = vld [vmem:[%s323 + $0x8c] sm:$0xf]
        %v420 = vld [vmem:[%s323 + $0x90] sm:$0xf]
        %v421 = vld [vmem:[%s323 + $0x94] sm:$0xf]
        %v422 = vld [vmem:[%s323 + $0x98] sm:$0xf]
        %v423 = vld [vmem:[%s323 + $0x9c] sm:$0xf]
        %v424 = vld [vmem:[%s323 + $0xa0] sm:$0xf]
        %v425 = vld [vmem:[%s323 + $0xa4] sm:$0xf]
        %v426 = vld [vmem:[%s323 + $0xa8] sm:$0xf]
        %v427 = vld [vmem:[%s323 + $0xac] sm:$0xf]
        %v428 = vld [vmem:[%s323 + $0xb0] sm:$0xf]
        %v429 = vld [vmem:[%s323 + $0xb4] sm:$0xf]
        %v430 = vld [vmem:[%s323 + $0xb8] sm:$0xf]
        %v431 = vld [vmem:[%s323 + $0xbc] sm:$0xf]
        %v432 = vld [vmem:[%s323 + $0xc0] sm:$0xf]
        %v433 = vld [vmem:[%s323 + $0xc4] sm:$0xf]
        %v434 = vld [vmem:[%s323 + $0xc8] sm:$0xf]
        %v435 = vld [vmem:[%s323 + $0xcc] sm:$0xf]
        %v436 = vld [vmem:[%s323 + $0xd0] sm:$0xf]
        %v437 = vld [vmem:[%s323 + $0xd4] sm:$0xf]
        %v438 = vld [vmem:[%s323 + $0xd8] sm:$0xf]
        %v439 = vld [vmem:[%s323 + $0xdc] sm:$0xf]
        %v440 = vld [vmem:[%s323 + $0xe0] sm:$0xf]
        %v441 = vld [vmem:[%s323 + $0xe4] sm:$0xf]
        %v442 = vld [vmem:[%s323 + $0xe8] sm:$0xf]
        %v443 = vld [vmem:[%s323 + $0xec] sm:$0xf]
        %v444 = vld [vmem:[%s323 + $0xf0] sm:$0xf]
        %v445 = vld [vmem:[%s323 + $0xf4] sm:$0xf]
        %v446 = vld [vmem:[%s323 + $0xf8] sm:$0xf]
        %v447 = vld [vmem:[%s323 + $0xfc] sm:$0xf]
        %v448 = vld [vmem:[#allocation7] sm:$0xf]
        %v449 = vld [vmem:[#allocation7 + $0x4] sm:$0xf]
        %v450 = vld [vmem:[#allocation7 + $0x8] sm:$0xf]
        %v451 = vld [vmem:[#allocation7 + $0xc] sm:$0xf]
        %v452 = vld [vmem:[#allocation7 + $0x10] sm:$0xf]
        %v453 = vld [vmem:[#allocation7 + $0x14] sm:$0xf]
        %v454 = vld [vmem:[#allocation7 + $0x18] sm:$0xf]
        %v455 = vld [vmem:[#allocation7 + $0x1c] sm:$0xf]
        %v456 = vld [vmem:[#allocation7 + $0x20] sm:$0xf]
        %v457 = vld [vmem:[#allocation7 + $0x24] sm:$0xf]
        %v458 = vld [vmem:[#allocation7 + $0x28] sm:$0xf]
        %v459 = vld [vmem:[#allocation7 + $0x2c] sm:$0xf]
        %v460 = vld [vmem:[#allocation7 + $0x30] sm:$0xf]
        %v461 = vld [vmem:[#allocation7 + $0x34] sm:$0xf]
        %v462 = vld [vmem:[#allocation7 + $0x38] sm:$0xf]
        %v463 = vld [vmem:[#allocation7 + $0x3c] sm:$0xf]
        %v464 = vld [vmem:[%s332] sm:$0xf]
        %v465 = vld [vmem:[%s332 + $0x4] sm:$0xf]
        %v466 = vld [vmem:[%s332 + $0x8] sm:$0xf]
        %v467 = vld [vmem:[%s332 + $0xc] sm:$0xf]
        %v468 = vld [vmem:[%s332 + $0x10] sm:$0xf]
        %v469 = vld [vmem:[%s332 + $0x14] sm:$0xf]
        %v470 = vld [vmem:[%s332 + $0x18] sm:$0xf]
        %v471 = vld [vmem:[%s332 + $0x1c] sm:$0xf]
        %v472 = vld [vmem:[%s332 + $0x20] sm:$0xf]
        %v473 = vld [vmem:[%s332 + $0x24] sm:$0xf]
        %v474 = vld [vmem:[%s332 + $0x28] sm:$0xf]
        %v475 = vld [vmem:[%s332 + $0x2c] sm:$0xf]
        %v476 = vld [vmem:[%s332 + $0x30] sm:$0xf]
        %v477 = vld [vmem:[%s332 + $0x34] sm:$0xf]
        %v478 = vld [vmem:[%s332 + $0x38] sm:$0xf]
        %v479 = vld [vmem:[%s332 + $0x3c] sm:$0xf]
        %v480 = vld [vmem:[%s332 + $0x40] sm:$0xf]
        %v481 = vld [vmem:[%s332 + $0x44] sm:$0xf]
        %v482 = vld [vmem:[%s332 + $0x48] sm:$0xf]
        %v483 = vld [vmem:[%s332 + $0x4c] sm:$0xf]
        %v484 = vld [vmem:[%s332 + $0x50] sm:$0xf]
        %v485 = vld [vmem:[%s332 + $0x54] sm:$0xf]
        %v486 = vld [vmem:[%s332 + $0x58] sm:$0xf]
        %v487 = vld [vmem:[%s332 + $0x5c] sm:$0xf]
        %v488 = vld [vmem:[%s332 + $0x60] sm:$0xf]
        %v489 = vld [vmem:[%s332 + $0x64] sm:$0xf]
        %v490 = vld [vmem:[%s332 + $0x68] sm:$0xf]
        %v491 = vld [vmem:[%s332 + $0x6c] sm:$0xf]
        %v492 = vld [vmem:[%s332 + $0x70] sm:$0xf]
        %v493 = vld [vmem:[%s332 + $0x74] sm:$0xf]
        %v494 = vld [vmem:[%s332 + $0x78] sm:$0xf]
        %v495 = vld [vmem:[%s332 + $0x7c] sm:$0xf]
        %v496 = vld [vmem:[%s332 + $0x80] sm:$0xf]
        %v497 = vld [vmem:[%s332 + $0x84] sm:$0xf]
        %v498 = vld [vmem:[%s332 + $0x88] sm:$0xf]
        %v499 = vld [vmem:[%s332 + $0x8c] sm:$0xf]
        %v500 = vld [vmem:[%s332 + $0x90] sm:$0xf]
        %v501 = vld [vmem:[%s332 + $0x94] sm:$0xf]
        %v502 = vld [vmem:[%s332 + $0x98] sm:$0xf]
        %v503 = vld [vmem:[%s332 + $0x9c] sm:$0xf]
        %v504 = vld [vmem:[%s332 + $0xa0] sm:$0xf]
        %v505 = vld [vmem:[%s332 + $0xa4] sm:$0xf]
        %v506 = vld [vmem:[%s332 + $0xa8] sm:$0xf]
        %v507 = vld [vmem:[%s332 + $0xac] sm:$0xf]
        %v508 = vld [vmem:[%s332 + $0xb0] sm:$0xf]
        %v509 = vld [vmem:[%s332 + $0xb4] sm:$0xf]
        %v510 = vld [vmem:[%s332 + $0xb8] sm:$0xf]
        %v511 = vld [vmem:[%s332 + $0xbc] sm:$0xf]
        %v512 = vld [vmem:[%s332 + $0xc0] sm:$0xf]
        %v513 = vld [vmem:[%s332 + $0xc4] sm:$0xf]
        %v514 = vld [vmem:[%s332 + $0xc8] sm:$0xf]
        %v515 = vld [vmem:[%s332 + $0xcc] sm:$0xf]
        %v516 = vld [vmem:[%s332 + $0xd0] sm:$0xf]
        %v517 = vld [vmem:[%s332 + $0xd4] sm:$0xf]
        %v518 = vld [vmem:[%s332 + $0xd8] sm:$0xf]
        %v519 = vld [vmem:[%s332 + $0xdc] sm:$0xf]
        %v520 = vld [vmem:[%s332 + $0xe0] sm:$0xf]
        %v521 = vld [vmem:[%s332 + $0xe4] sm:$0xf]
        %v522 = vld [vmem:[%s332 + $0xe8] sm:$0xf]
        %v523 = vld [vmem:[%s332 + $0xec] sm:$0xf]
        %v524 = vld [vmem:[%s332 + $0xf0] sm:$0xf]
        %v525 = vld [vmem:[%s332 + $0xf4] sm:$0xf]
        %v526 = vld [vmem:[%s332 + $0xf8] sm:$0xf]
        %v527 = vld [vmem:[%s332 + $0xfc] sm:$0xf]
        %v528 = vld [vmem:[#allocation8] sm:$0xf]
        %v529 = vld [vmem:[#allocation8 + $0x4] sm:$0xf]
        %v530 = vld [vmem:[#allocation8 + $0x8] sm:$0xf]
        %v531 = vld [vmem:[#allocation8 + $0xc] sm:$0xf]
        %v532 = vld [vmem:[#allocation8 + $0x10] sm:$0xf]
        %v533 = vld [vmem:[#allocation8 + $0x14] sm:$0xf]
        %v534 = vld [vmem:[#allocation8 + $0x18] sm:$0xf]
        %v535 = vld [vmem:[#allocation8 + $0x1c] sm:$0xf]
        %v536 = vld [vmem:[#allocation8 + $0x20] sm:$0xf]
        %v537 = vld [vmem:[#allocation8 + $0x24] sm:$0xf]
        %v538 = vld [vmem:[#allocation8 + $0x28] sm:$0xf]
        %v539 = vld [vmem:[#allocation8 + $0x2c] sm:$0xf]
        %v540 = vld [vmem:[#allocation8 + $0x30] sm:$0xf]
        %v541 = vld [vmem:[#allocation8 + $0x34] sm:$0xf]
        %v542 = vld [vmem:[#allocation8 + $0x38] sm:$0xf]
        %v543 = vld [vmem:[#allocation8 + $0x3c] sm:$0xf]
        %v608 = vunpack.c.l.b16 %v464
        %v609 = vunpack.c.l.b16 %v465
        %v610 = vunpack.c.l.b16 %v466
        %v611 = vunpack.c.l.b16 %v467
        %v612 = vunpack.c.l.b16 %v468
        %v613 = vunpack.c.l.b16 %v469
        %v614 = vunpack.c.l.b16 %v470
        %v615 = vunpack.c.l.b16 %v471
        %v616 = vunpack.c.l.b16 %v472
        %v617 = vunpack.c.l.b16 %v473
        %v618 = vunpack.c.l.b16 %v474
        %v619 = vunpack.c.l.b16 %v475
        %v620 = vunpack.c.l.b16 %v476
        %v621 = vunpack.c.l.b16 %v477
        %v622 = vunpack.c.l.b16 %v478
        %v623 = vunpack.c.l.b16 %v479
        %v624 = vunpack.c.l.b16 %v480
        %v625 = vunpack.c.l.b16 %v481
        %v626 = vunpack.c.l.b16 %v482
        %v627 = vunpack.c.l.b16 %v483
        %v628 = vunpack.c.l.b16 %v484
        %v629 = vunpack.c.l.b16 %v485
        %v630 = vunpack.c.l.b16 %v486
        %v631 = vunpack.c.l.b16 %v487
        %v632 = vunpack.c.l.b16 %v488
        %v633 = vunpack.c.l.b16 %v489
        %v634 = vunpack.c.l.b16 %v490
        %v635 = vunpack.c.l.b16 %v491
        %v636 = vunpack.c.l.b16 %v492
        %v637 = vunpack.c.l.b16 %v493
        %v638 = vunpack.c.l.b16 %v494
        %v639 = vunpack.c.l.b16 %v495
        %v640 = vunpack.c.l.b16 %v496
        %v641 = vunpack.c.l.b16 %v497
        %v642 = vunpack.c.l.b16 %v498
        %v643 = vunpack.c.l.b16 %v499
        %v644 = vunpack.c.l.b16 %v500
        %v645 = vunpack.c.l.b16 %v501
        %v646 = vunpack.c.l.b16 %v502
        %v647 = vunpack.c.l.b16 %v503
        %v648 = vunpack.c.l.b16 %v504
        %v649 = vunpack.c.l.b16 %v505
        %v650 = vunpack.c.l.b16 %v506
        %v651 = vunpack.c.l.b16 %v507
        %v652 = vunpack.c.l.b16 %v508
        %v653 = vunpack.c.l.b16 %v509
        %v654 = vunpack.c.l.b16 %v510
        %v655 = vunpack.c.l.b16 %v511
        %v656 = vunpack.c.l.b16 %v512
        %v657 = vunpack.c.l.b16 %v513
        %v658 = vunpack.c.l.b16 %v514
        %v659 = vunpack.c.l.b16 %v515
        %v660 = vunpack.c.l.b16 %v516
        %v661 = vunpack.c.l.b16 %v517
        %v662 = vunpack.c.l.b16 %v518
        %v663 = vunpack.c.l.b16 %v519
        %v664 = vunpack.c.l.b16 %v520
        %v665 = vunpack.c.l.b16 %v521
        %v666 = vunpack.c.l.b16 %v522
        %v667 = vunpack.c.l.b16 %v523
        %v668 = vunpack.c.l.b16 %v524
        %v669 = vunpack.c.l.b16 %v525
        %v670 = vunpack.c.l.b16 %v526
        %v671 = vunpack.c.l.b16 %v527
        %v672 = vpack.c.b16 %v609, %v608
        %v673 = vpack.c.b16 %v611, %v610
        %v674 = vpack.c.b16 %v613, %v612
        %v675 = vpack.c.b16 %v615, %v614
        %v676 = vpack.c.b16 %v617, %v616
        %v677 = vpack.c.b16 %v619, %v618
        %v678 = vpack.c.b16 %v621, %v620
        %v679 = vpack.c.b16 %v623, %v622
        %v680 = vpack.c.b16 %v625, %v624
        %v681 = vpack.c.b16 %v627, %v626
        %v682 = vpack.c.b16 %v629, %v628
        %v683 = vpack.c.b16 %v631, %v630
        %v684 = vpack.c.b16 %v633, %v632
        %v685 = vpack.c.b16 %v635, %v634
        %v686 = vpack.c.b16 %v637, %v636
        %v687 = vpack.c.b16 %v639, %v638
        %v688 = vpack.c.b16 %v641, %v640
        %v689 = vpack.c.b16 %v643, %v642
        %v690 = vpack.c.b16 %v645, %v644
        %v691 = vpack.c.b16 %v647, %v646
        %v692 = vpack.c.b16 %v649, %v648
        %v693 = vpack.c.b16 %v651, %v650
        %v694 = vpack.c.b16 %v653, %v652
        %v695 = vpack.c.b16 %v655, %v654
        %v696 = vpack.c.b16 %v657, %v656
        %v697 = vpack.c.b16 %v659, %v658
        %v698 = vpack.c.b16 %v661, %v660
        %v699 = vpack.c.b16 %v663, %v662
        %v700 = vpack.c.b16 %v665, %v664
        %v701 = vpack.c.b16 %v667, %v666
        %v702 = vpack.c.b16 %v669, %v668
        %v703 = vpack.c.b16 %v671, %v670
        %v752 = vunpack.c.l.b16 %v528
        %v753 = vunpack.c.l.b16 %v529
        %v754 = vunpack.c.l.b16 %v530
        %v755 = vunpack.c.l.b16 %v531
        %v756 = vunpack.c.l.b16 %v532
        %v757 = vunpack.c.l.b16 %v533
        %v758 = vunpack.c.l.b16 %v534
        %v759 = vunpack.c.l.b16 %v535
        %v760 = vunpack.c.l.b16 %v536
        %v761 = vunpack.c.l.b16 %v537
        %v762 = vunpack.c.l.b16 %v538
        %v763 = vunpack.c.l.b16 %v539
        %v764 = vunpack.c.l.b16 %v540
        %v765 = vunpack.c.l.b16 %v541
        %v766 = vunpack.c.l.b16 %v542
        %v767 = vunpack.c.l.b16 %v543
        %v768 = vpack.c.b16 %v753, %v752
        %v769 = vpack.c.b16 %v755, %v754
        %v770 = vpack.c.b16 %v757, %v756
        %v771 = vpack.c.b16 %v759, %v758
        %v772 = vpack.c.b16 %v761, %v760
        %v773 = vpack.c.b16 %v763, %v762
        %v774 = vpack.c.b16 %v765, %v764
        %v775 = vpack.c.b16 %v767, %v766
        %784 = vmatprep.subr.bf16.mxu0 0
        %785 = vmatpush1.bf16.msra.mxu0 %v768
        %786 = vmatprep.subr.bf16.mxu0 0
        %787 = vmatpush1.bf16.msra.mxu0 %v769
        %788 = vmatprep.subr.bf16.mxu0 0
        %789 = vmatpush1.bf16.msra.mxu0 %v770
        %790 = vmatprep.subr.bf16.mxu0 0
        %791 = vmatpush1.bf16.msra.mxu0 %v771
        %792 = vmatprep.subr.bf16.mxu0 0
        %793 = vmatpush1.bf16.msra.mxu0 %v772
        %794 = vmatprep.subr.bf16.mxu0 0
        %795 = vmatpush1.bf16.msra.mxu0 %v773
        %796 = vmatprep.subr.bf16.mxu0 0
        %797 = vmatpush1.bf16.msra.mxu0 %v774
        %798 = vmatprep.subr.bf16.mxu0 0
        %799 = vmatpush1.bf16.msra.mxu0 %v775
        %800 = vmatprep.subr.bf16.mxu0 0
        %801 = vmatpush1.bf16.msra.mxu0 0
        %802 = vmatprep.subr.bf16.mxu0 0
        %803 = vmatpush1.bf16.msra.mxu0 0
        %804 = vmatprep.subr.bf16.mxu0 0
        %805 = vmatpush1.bf16.msra.mxu0 0
        %806 = vmatprep.subr.bf16.mxu0 0
        %807 = vmatpush1.bf16.msra.mxu0 0
        %808 = vmatprep.subr.bf16.mxu0 0
        %809 = vmatpush1.bf16.msra.mxu0 0
        %810 = vmatprep.subr.bf16.mxu0 0
        %811 = vmatpush1.bf16.msra.mxu0 0
        %812 = vmatprep.subr.bf16.mxu0 0
        %813 = vmatpush1.bf16.msra.mxu0 0
        %814 = vmatprep.subr.bf16.mxu0 0
        %815 = vmatpush1.bf16.msra.mxu0 0
        %816 = vmatprep.mubr.bf16.mxu0 0
        %817 = vmatmul.mubr.bf16.gmra.mrb[0].mxu0 %v672
        %v818 = vpop.f32.mrb[0].mxu0
        %v819 = vadd.f32 0.0, %v818
        %v820 = vpop.f32.mrb[0].mxu0
        %v821 = vpop.f32.mrb[0].mxu0
        %v822 = vadd.f32 0.0, %v821
        %v823 = vpop.f32.mrb[0].mxu0
        %824 = vmatprep.mubr.bf16.mxu0 0
        %825 = vmatmul.mubr.bf16.gmra.mrb[0].mxu0 %v673
        %v826 = vpop.f32.mrb[0].mxu0
        %v827 = vadd.f32 0.0, %v826
        %v828 = vpop.f32.mrb[0].mxu0
        %v829 = vpop.f32.mrb[0].mxu0
        %v830 = vadd.f32 0.0, %v829
        %v831 = vpop.f32.mrb[0].mxu0
        %832 = vmatprep.mubr.bf16.mxu0 0
        %833 = vmatmul.mubr.bf16.gmra.mrb[0].mxu0 %v674
        %v834 = vpop.f32.mrb[0].mxu0
        %v835 = vadd.f32 0.0, %v834
        %v836 = vpop.f32.mrb[0].mxu0
        %v837 = vpop.f32.mrb[0].mxu0
        %v838 = vadd.f32 0.0, %v837
        %v839 = vpop.f32.mrb[0].mxu0
        %840 = vmatprep.mubr.bf16.mxu0 0
        %841 = vmatmul.mubr.bf16.gmra.mrb[0].mxu0 %v675
        %v842 = vpop.f32.mrb[0].mxu0
        %v843 = vadd.f32 0.0, %v842
        %v844 = vpop.f32.mrb[0].mxu0
        %v845 = vpop.f32.mrb[0].mxu0
        %v846 = vadd.f32 0.0, %v845
        %v847 = vpop.f32.mrb[0].mxu0
        %848 = vmatprep.mubr.bf16.mxu0 0
        %849 = vmatmul.mubr.bf16.gmra.mrb[0].mxu0 %v676
        %v850 = vpop.f32.mrb[0].mxu0
        %v851 = vadd.f32 0.0, %v850
        %v852 = vpop.f32.mrb[0].mxu0
        %v853 = vpop.f32.mrb[0].mxu0
        %v854 = vadd.f32 0.0, %v853
        %v855 = vpop.f32.mrb[0].mxu0
        %856 = vmatprep.mubr.bf16.mxu0 0
        %857 = vmatmul.mubr.bf16.gmra.mrb[0].mxu0 %v677
        %v858 = vpop.f32.mrb[0].mxu0
        %v859 = vadd.f32 0.0, %v858
        %v860 = vpop.f32.mrb[0].mxu0
        %v861 = vpop.f32.mrb[0].mxu0
        %v862 = vadd.f32 0.0, %v861
        %v863 = vpop.f32.mrb[0].mxu0
        %864 = vmatprep.mubr.bf16.mxu0 0
        %865 = vmatmul.mubr.bf16.gmra.mrb[0].mxu0 %v678
        %v866 = vpop.f32.mrb[0].mxu0
        %v867 = vadd.f32 0.0, %v866
        %v868 = vpop.f32.mrb[0].mxu0
        %v869 = vpop.f32.mrb[0].mxu0
        %v870 = vadd.f32 0.0, %v869
        %v871 = vpop.f32.mrb[0].mxu0
        %872 = vmatprep.mubr.bf16.mxu0 0
        %873 = vmatmul.mubr.bf16.gmra.mrb[0].mxu0 %v679
        %v874 = vpop.f32.mrb[0].mxu0
        %v875 = vadd.f32 0.0, %v874
        %v876 = vpop.f32.mrb[0].mxu0
        %v877 = vpop.f32.mrb[0].mxu0
        %v878 = vadd.f32 0.0, %v877
        %v879 = vpop.f32.mrb[0].mxu0
        %880 = vmatprep.mubr.bf16.mxu0 0
        %881 = vmatmul.mubr.bf16.gmra.mrb[0].mxu0 %v680
        %v882 = vpop.f32.mrb[0].mxu0
        %v883 = vadd.f32 0.0, %v882
        %v884 = vpop.f32.mrb[0].mxu0
        %v885 = vpop.f32.mrb[0].mxu0
        %v886 = vadd.f32 0.0, %v885
        %v887 = vpop.f32.mrb[0].mxu0
        %888 = vmatprep.mubr.bf16.mxu0 0
        %889 = vmatmul.mubr.bf16.gmra.mrb[0].mxu0 %v681
        %v890 = vpop.f32.mrb[0].mxu0
        %v891 = vadd.f32 0.0, %v890
        %v892 = vpop.f32.mrb[0].mxu0
        %v893 = vpop.f32.mrb[0].mxu0
        %v894 = vadd.f32 0.0, %v893
        %v895 = vpop.f32.mrb[0].mxu0
        %896 = vmatprep.mubr.bf16.mxu0 0
        %897 = vmatmul.mubr.bf16.gmra.mrb[0].mxu0 %v682
        %v898 = vpop.f32.mrb[0].mxu0
        %v899 = vadd.f32 0.0, %v898
        %v900 = vpop.f32.mrb[0].mxu0
        %v901 = vpop.f32.mrb[0].mxu0
        %v902 = vadd.f32 0.0, %v901
        %v903 = vpop.f32.mrb[0].mxu0
        %904 = vmatprep.mubr.bf16.mxu0 0
        %905 = vmatmul.mubr.bf16.gmra.mrb[0].mxu0 %v683
        %v906 = vpop.f32.mrb[0].mxu0
        %v907 = vadd.f32 0.0, %v906
        %v908 = vpop.f32.mrb[0].mxu0
        %v909 = vpop.f32.mrb[0].mxu0
        %v910 = vadd.f32 0.0, %v909
        %v911 = vpop.f32.mrb[0].mxu0
        %912 = vmatprep.mubr.bf16.mxu0 0
        %913 = vmatmul.mubr.bf16.gmra.mrb[0].mxu0 %v684
        %v914 = vpop.f32.mrb[0].mxu0
        %v915 = vadd.f32 0.0, %v914
        %v916 = vpop.f32.mrb[0].mxu0
        %v917 = vpop.f32.mrb[0].mxu0
        %v918 = vadd.f32 0.0, %v917
        %v919 = vpop.f32.mrb[0].mxu0
        %920 = vmatprep.mubr.bf16.mxu0 0
        %921 = vmatmul.mubr.bf16.gmra.mrb[0].mxu0 %v685
        %v922 = vpop.f32.mrb[0].mxu0
        %v923 = vadd.f32 0.0, %v922
        %v924 = vpop.f32.mrb[0].mxu0
        %v925 = vpop.f32.mrb[0].mxu0
        %v926 = vadd.f32 0.0, %v925
        %v927 = vpop.f32.mrb[0].mxu0
        %928 = vmatprep.mubr.bf16.mxu0 0
        %929 = vmatmul.mubr.bf16.gmra.mrb[0].mxu0 %v686
        %v930 = vpop.f32.mrb[0].mxu0
        %v931 = vadd.f32 0.0, %v930
        %v932 = vpop.f32.mrb[0].mxu0
        %v933 = vpop.f32.mrb[0].mxu0
        %v934 = vadd.f32 0.0, %v933
        %v935 = vpop.f32.mrb[0].mxu0
        %936 = vmatprep.mubr.bf16.mxu0 0
        %937 = vmatmul.mubr.bf16.gmra.mrb[0].mxu0 %v687
        %v938 = vpop.f32.mrb[0].mxu0
        %v939 = vadd.f32 0.0, %v938
        %v940 = vpop.f32.mrb[0].mxu0
        %v941 = vpop.f32.mrb[0].mxu0
        %v942 = vadd.f32 0.0, %v941
        %v943 = vpop.f32.mrb[0].mxu0
        %944 = vmatprep.mubr.bf16.mxu0 0
        %945 = vmatmul.mubr.bf16.gmra.mrb[0].mxu0 %v688
        %v946 = vpop.f32.mrb[0].mxu0
        %v947 = vadd.f32 0.0, %v946
        %v948 = vpop.f32.mrb[0].mxu0
        %v949 = vpop.f32.mrb[0].mxu0
        %v950 = vadd.f32 0.0, %v949
        %v951 = vpop.f32.mrb[0].mxu0
        %952 = vmatprep.mubr.bf16.mxu0 0
        %953 = vmatmul.mubr.bf16.gmra.mrb[0].mxu0 %v689
        %v954 = vpop.f32.mrb[0].mxu0
        %v955 = vadd.f32 0.0, %v954
        %v956 = vpop.f32.mrb[0].mxu0
        %v957 = vpop.f32.mrb[0].mxu0
        %v958 = vadd.f32 0.0, %v957
        %v959 = vpop.f32.mrb[0].mxu0
        %960 = vmatprep.mubr.bf16.mxu0 0
        %961 = vmatmul.mubr.bf16.gmra.mrb[0].mxu0 %v690
        %v962 = vpop.f32.mrb[0].mxu0
        %v963 = vadd.f32 0.0, %v962
        %v964 = vpop.f32.mrb[0].mxu0
        %v965 = vpop.f32.mrb[0].mxu0
        %v966 = vadd.f32 0.0, %v965
        %v967 = vpop.f32.mrb[0].mxu0
        %968 = vmatprep.mubr.bf16.mxu0 0
        %969 = vmatmul.mubr.bf16.gmra.mrb[0].mxu0 %v691
        %v970 = vpop.f32.mrb[0].mxu0
        %v971 = vadd.f32 0.0, %v970
        %v972 = vpop.f32.mrb[0].mxu0
        %v973 = vpop.f32.mrb[0].mxu0
        %v974 = vadd.f32 0.0, %v973
        %v975 = vpop.f32.mrb[0].mxu0
        %976 = vmatprep.mubr.bf16.mxu0 0
        %977 = vmatmul.mubr.bf16.gmra.mrb[0].mxu0 %v692
        %v978 = vpop.f32.mrb[0].mxu0
        %v979 = vadd.f32 0.0, %v978
        %v980 = vpop.f32.mrb[0].mxu0
        %v981 = vpop.f32.mrb[0].mxu0
        %v982 = vadd.f32 0.0, %v981
        %v983 = vpop.f32.mrb[0].mxu0
        %984 = vmatprep.mubr.bf16.mxu0 0
        %985 = vmatmul.mubr.bf16.gmra.mrb[0].mxu0 %v693
        %v986 = vpop.f32.mrb[0].mxu0
        %v987 = vadd.f32 0.0, %v986
        %v988 = vpop.f32.mrb[0].mxu0
        %v989 = vpop.f32.mrb[0].mxu0
        %v990 = vadd.f32 0.0, %v989
        %v991 = vpop.f32.mrb[0].mxu0
        %992 = vmatprep.mubr.bf16.mxu0 0
        %993 = vmatmul.mubr.bf16.gmra.mrb[0].mxu0 %v694
        %v994 = vpop.f32.mrb[0].mxu0
        %v995 = vadd.f32 0.0, %v994
        %v996 = vpop.f32.mrb[0].mxu0
        %v997 = vpop.f32.mrb[0].mxu0
        %v998 = vadd.f32 0.0, %v997
        %v999 = vpop.f32.mrb[0].mxu0
        %1000 = vmatprep.mubr.bf16.mxu0 0
        %1001 = vmatmul.mubr.bf16.gmra.mrb[0].mxu0 %v695
        %v1002 = vpop.f32.mrb[0].mxu0
        %v1003 = vadd.f32 0.0, %v1002
        %v1004 = vpop.f32.mrb[0].mxu0
        %v1005 = vpop.f32.mrb[0].mxu0
        %v1006 = vadd.f32 0.0, %v1005
        %v1007 = vpop.f32.mrb[0].mxu0
        %1008 = vmatprep.mubr.bf16.mxu0 0
        %1009 = vmatmul.mubr.bf16.gmra.mrb[0].mxu0 %v696
        %v1010 = vpop.f32.mrb[0].mxu0
        %v1011 = vadd.f32 0.0, %v1010
        %v1012 = vpop.f32.mrb[0].mxu0
        %v1013 = vpop.f32.mrb[0].mxu0
        %v1014 = vadd.f32 0.0, %v1013
        %v1015 = vpop.f32.mrb[0].mxu0
        %1016 = vmatprep.mubr.bf16.mxu0 0
        %1017 = vmatmul.mubr.bf16.gmra.mrb[0].mxu0 %v697
        %v1018 = vpop.f32.mrb[0].mxu0
        %v1019 = vadd.f32 0.0, %v1018
        %v1020 = vpop.f32.mrb[0].mxu0
        %v1021 = vpop.f32.mrb[0].mxu0
        %v1022 = vadd.f32 0.0, %v1021
        %v1023 = vpop.f32.mrb[0].mxu0
        %1024 = vmatprep.mubr.bf16.mxu0 0
        %1025 = vmatmul.mubr.bf16.gmra.mrb[0].mxu0 %v698
        %v1026 = vpop.f32.mrb[0].mxu0
        %v1027 = vadd.f32 0.0, %v1026
        %v1028 = vpop.f32.mrb[0].mxu0
        %v1029 = vpop.f32.mrb[0].mxu0
        %v1030 = vadd.f32 0.0, %v1029
        %v1031 = vpop.f32.mrb[0].mxu0
        %1032 = vmatprep.mubr.bf16.mxu0 0
        %1033 = vmatmul.mubr.bf16.gmra.mrb[0].mxu0 %v699
        %v1034 = vpop.f32.mrb[0].mxu0
        %v1035 = vadd.f32 0.0, %v1034
        %v1036 = vpop.f32.mrb[0].mxu0
        %v1037 = vpop.f32.mrb[0].mxu0
        %v1038 = vadd.f32 0.0, %v1037
        %v1039 = vpop.f32.mrb[0].mxu0
        %1040 = vmatprep.mubr.bf16.mxu0 0
        %1041 = vmatmul.mubr.bf16.gmra.mrb[0].mxu0 %v700
        %v1042 = vpop.f32.mrb[0].mxu0
        %v1043 = vadd.f32 0.0, %v1042
        %v1044 = vpop.f32.mrb[0].mxu0
        %v1045 = vpop.f32.mrb[0].mxu0
        %v1046 = vadd.f32 0.0, %v1045
        %v1047 = vpop.f32.mrb[0].mxu0
        %1048 = vmatprep.mubr.bf16.mxu0 0
        %1049 = vmatmul.mubr.bf16.gmra.mrb[0].mxu0 %v701
        %v1050 = vpop.f32.mrb[0].mxu0
        %v1051 = vadd.f32 0.0, %v1050
        %v1052 = vpop.f32.mrb[0].mxu0
        %v1053 = vpop.f32.mrb[0].mxu0
        %v1054 = vadd.f32 0.0, %v1053
        %v1055 = vpop.f32.mrb[0].mxu0
        %1056 = vmatprep.mubr.bf16.mxu0 0
        %1057 = vmatmul.mubr.bf16.gmra.mrb[0].mxu0 %v702
        %v1058 = vpop.f32.mrb[0].mxu0
        %v1059 = vadd.f32 0.0, %v1058
        %v1060 = vpop.f32.mrb[0].mxu0
        %v1061 = vpop.f32.mrb[0].mxu0
        %v1062 = vadd.f32 0.0, %v1061
        %v1063 = vpop.f32.mrb[0].mxu0
        %1064 = vmatprep.mubr.bf16.mxu0 0
        %1065 = vmatmul.mubr.bf16.gmra.mrb[0].mxu0 %v703
        %v1066 = vpop.f32.mrb[0].mxu0
        %v1067 = vadd.f32 0.0, %v1066
        %v1068 = vpop.f32.mrb[0].mxu0
        %v1069 = vpop.f32.mrb[0].mxu0
        %v1070 = vadd.f32 0.0, %v1069
        %v1071 = vpop.f32.mrb[0].mxu0
        %1072 = vdwg.mxu0
        %v1137 = vunpack.c.l.b16 %v384
        %v1138 = vunpack.c.l.b16 %v385
        %v1139 = vunpack.c.l.b16 %v386
        %v1140 = vunpack.c.l.b16 %v387
        %v1141 = vunpack.c.l.b16 %v388
        %v1142 = vunpack.c.l.b16 %v389
        %v1143 = vunpack.c.l.b16 %v390
        %v1144 = vunpack.c.l.b16 %v391
        %v1145 = vunpack.c.l.b16 %v392
        %v1146 = vunpack.c.l.b16 %v393
        %v1147 = vunpack.c.l.b16 %v394
        %v1148 = vunpack.c.l.b16 %v395
        %v1149 = vunpack.c.l.b16 %v396
        %v1150 = vunpack.c.l.b16 %v397
        %v1151 = vunpack.c.l.b16 %v398
        %v1152 = vunpack.c.l.b16 %v399
        %v1153 = vunpack.c.l.b16 %v400
        %v1154 = vunpack.c.l.b16 %v401
        %v1155 = vunpack.c.l.b16 %v402
        %v1156 = vunpack.c.l.b16 %v403
        %v1157 = vunpack.c.l.b16 %v404
        %v1158 = vunpack.c.l.b16 %v405
        %v1159 = vunpack.c.l.b16 %v406
        %v1160 = vunpack.c.l.b16 %v407
        %v1161 = vunpack.c.l.b16 %v408
        %v1162 = vunpack.c.l.b16 %v409
        %v1163 = vunpack.c.l.b16 %v410
        %v1164 = vunpack.c.l.b16 %v411
        %v1165 = vunpack.c.l.b16 %v412
        %v1166 = vunpack.c.l.b16 %v413
        %v1167 = vunpack.c.l.b16 %v414
        %v1168 = vunpack.c.l.b16 %v415
        %v1169 = vunpack.c.l.b16 %v416
        %v1170 = vunpack.c.l.b16 %v417
        %v1171 = vunpack.c.l.b16 %v418
        %v1172 = vunpack.c.l.b16 %v419
        %v1173 = vunpack.c.l.b16 %v420
        %v1174 = vunpack.c.l.b16 %v421
        %v1175 = vunpack.c.l.b16 %v422
        %v1176 = vunpack.c.l.b16 %v423
        %v1177 = vunpack.c.l.b16 %v424
        %v1178 = vunpack.c.l.b16 %v425
        %v1179 = vunpack.c.l.b16 %v426
        %v1180 = vunpack.c.l.b16 %v427
        %v1181 = vunpack.c.l.b16 %v428
        %v1182 = vunpack.c.l.b16 %v429
        %v1183 = vunpack.c.l.b16 %v430
        %v1184 = vunpack.c.l.b16 %v431
        %v1185 = vunpack.c.l.b16 %v432
        %v1186 = vunpack.c.l.b16 %v433
        %v1187 = vunpack.c.l.b16 %v434
        %v1188 = vunpack.c.l.b16 %v435
        %v1189 = vunpack.c.l.b16 %v436
        %v1190 = vunpack.c.l.b16 %v437
        %v1191 = vunpack.c.l.b16 %v438
        %v1192 = vunpack.c.l.b16 %v439
        %v1193 = vunpack.c.l.b16 %v440
        %v1194 = vunpack.c.l.b16 %v441
        %v1195 = vunpack.c.l.b16 %v442
        %v1196 = vunpack.c.l.b16 %v443
        %v1197 = vunpack.c.l.b16 %v444
        %v1198 = vunpack.c.l.b16 %v445
        %v1199 = vunpack.c.l.b16 %v446
        %v1200 = vunpack.c.l.b16 %v447
        %v1201 = vpack.c.b16 %v1138, %v1137
        %v1202 = vpack.c.b16 %v1140, %v1139
        %v1203 = vpack.c.b16 %v1142, %v1141
        %v1204 = vpack.c.b16 %v1144, %v1143
        %v1205 = vpack.c.b16 %v1146, %v1145
        %v1206 = vpack.c.b16 %v1148, %v1147
        %v1207 = vpack.c.b16 %v1150, %v1149
        %v1208 = vpack.c.b16 %v1152, %v1151
        %v1209 = vpack.c.b16 %v1154, %v1153
        %v1210 = vpack.c.b16 %v1156, %v1155
        %v1211 = vpack.c.b16 %v1158, %v1157
        %v1212 = vpack.c.b16 %v1160, %v1159
        %v1213 = vpack.c.b16 %v1162, %v1161
        %v1214 = vpack.c.b16 %v1164, %v1163
        %v1215 = vpack.c.b16 %v1166, %v1165
        %v1216 = vpack.c.b16 %v1168, %v1167
        %v1217 = vpack.c.b16 %v1170, %v1169
        %v1218 = vpack.c.b16 %v1172, %v1171
        %v1219 = vpack.c.b16 %v1174, %v1173
        %v1220 = vpack.c.b16 %v1176, %v1175
        %v1221 = vpack.c.b16 %v1178, %v1177
        %v1222 = vpack.c.b16 %v1180, %v1179
        %v1223 = vpack.c.b16 %v1182, %v1181
        %v1224 = vpack.c.b16 %v1184, %v1183
        %v1225 = vpack.c.b16 %v1186, %v1185
        %v1226 = vpack.c.b16 %v1188, %v1187
        %v1227 = vpack.c.b16 %v1190, %v1189
        %v1228 = vpack.c.b16 %v1192, %v1191
        %v1229 = vpack.c.b16 %v1194, %v1193
        %v1230 = vpack.c.b16 %v1196, %v1195
        %v1231 = vpack.c.b16 %v1198, %v1197
        %v1232 = vpack.c.b16 %v1200, %v1199
        %v1281 = vunpack.c.l.b16 %v448
        %v1282 = vunpack.c.l.b16 %v449
        %v1283 = vunpack.c.l.b16 %v450
        %v1284 = vunpack.c.l.b16 %v451
        %v1285 = vunpack.c.l.b16 %v452
        %v1286 = vunpack.c.l.b16 %v453
        %v1287 = vunpack.c.l.b16 %v454
        %v1288 = vunpack.c.l.b16 %v455
        %v1289 = vunpack.c.l.b16 %v456
        %v1290 = vunpack.c.l.b16 %v457
        %v1291 = vunpack.c.l.b16 %v458
        %v1292 = vunpack.c.l.b16 %v459
        %v1293 = vunpack.c.l.b16 %v460
        %v1294 = vunpack.c.l.b16 %v461
        %v1295 = vunpack.c.l.b16 %v462
        %v1296 = vunpack.c.l.b16 %v463
        %v1297 = vpack.c.b16 %v1282, %v1281
        %v1298 = vpack.c.b16 %v1284, %v1283
        %v1299 = vpack.c.b16 %v1286, %v1285
        %v1300 = vpack.c.b16 %v1288, %v1287
        %v1301 = vpack.c.b16 %v1290, %v1289
        %v1302 = vpack.c.b16 %v1292, %v1291
        %v1303 = vpack.c.b16 %v1294, %v1293
        %v1304 = vpack.c.b16 %v1296, %v1295
        %1313 = vmatprep.subr.bf16.mxu0 0
        %1314 = vmatpush1.bf16.msra.mxu0 %v1297
        %1315 = vmatprep.subr.bf16.mxu0 0
        %1316 = vmatpush1.bf16.msra.mxu0 %v1298
        %1317 = vmatprep.subr.bf16.mxu0 0
        %1318 = vmatpush1.bf16.msra.mxu0 %v1299
        %1319 = vmatprep.subr.bf16.mxu0 0
        %1320 = vmatpush1.bf16.msra.mxu0 %v1300
        %1321 = vmatprep.subr.bf16.mxu0 0
        %1322 = vmatpush1.bf16.msra.mxu0 %v1301
        %1323 = vmatprep.subr.bf16.mxu0 0
        %1324 = vmatpush1.bf16.msra.mxu0 %v1302
        %1325 = vmatprep.subr.bf16.mxu0 0
        %1326 = vmatpush1.bf16.msra.mxu0 %v1303
        %1327 = vmatprep.subr.bf16.mxu0 0
        %1328 = vmatpush1.bf16.msra.mxu0 %v1304
        %1329 = vmatprep.subr.bf16.mxu0 0
        %1330 = vmatpush1.bf16.msra.mxu0 0
        %1331 = vmatprep.subr.bf16.mxu0 0
        %1332 = vmatpush1.bf16.msra.mxu0 0
        %1333 = vmatprep.subr.bf16.mxu0 0
        %1334 = vmatpush1.bf16.msra.mxu0 0
        %1335 = vmatprep.subr.bf16.mxu0 0
        %1336 = vmatpush1.bf16.msra.mxu0 0
        %1337 = vmatprep.subr.bf16.mxu0 0
        %1338 = vmatpush1.bf16.msra.mxu0 0
        %1339 = vmatprep.subr.bf16.mxu0 0
        %1340 = vmatpush1.bf16.msra.mxu0 0
        %1341 = vmatprep.subr.bf16.mxu0 0
        %1342 = vmatpush1.bf16.msra.mxu0 0
        %1343 = vmatprep.subr.bf16.mxu0 0
        %1344 = vmatpush1.bf16.msra.mxu0 0
        %1345 = vmatprep.mubr.bf16.mxu0 0
        %1346 = vmatmul.mubr.bf16.gmra.mrb[0].mxu0 %v1201
        %v1347 = vpop.f32.mrb[0].mxu0
        %v1348 = vadd.f32 %v819, %v1347
        %v1349 = vpop.f32.mrb[0].mxu0
        %v1350 = vpop.f32.mrb[0].mxu0
        %v1351 = vadd.f32 %v822, %v1350
        %v1352 = vpop.f32.mrb[0].mxu0
        %1353 = vmatprep.mubr.bf16.mxu0 0
        %1354 = vmatmul.mubr.bf16.gmra.mrb[0].mxu0 %v1202
        %v1355 = vpop.f32.mrb[0].mxu0
        %v1356 = vadd.f32 %v827, %v1355
        %v1357 = vpop.f32.mrb[0].mxu0
        %v1358 = vpop.f32.mrb[0].mxu0
        %v1359 = vadd.f32 %v830, %v1358
        %v1360 = vpop.f32.mrb[0].mxu0
        %1361 = vmatprep.mubr.bf16.mxu0 0
        %1362 = vmatmul.mubr.bf16.gmra.mrb[0].mxu0 %v1203
        %v1363 = vpop.f32.mrb[0].mxu0
        %v1364 = vadd.f32 %v835, %v1363
        %v1365 = vpop.f32.mrb[0].mxu0
        %v1366 = vpop.f32.mrb[0].mxu0
        %v1367 = vadd.f32 %v838, %v1366
        %v1368 = vpop.f32.mrb[0].mxu0
        %1369 = vmatprep.mubr.bf16.mxu0 0
        %1370 = vmatmul.mubr.bf16.gmra.mrb[0].mxu0 %v1204
        %v1371 = vpop.f32.mrb[0].mxu0
        %v1372 = vadd.f32 %v843, %v1371
        %v1373 = vpop.f32.mrb[0].mxu0
        %v1374 = vpop.f32.mrb[0].mxu0
        %v1375 = vadd.f32 %v846, %v1374
        %v1376 = vpop.f32.mrb[0].mxu0
        %1377 = vmatprep.mubr.bf16.mxu0 0
        %1378 = vmatmul.mubr.bf16.gmra.mrb[0].mxu0 %v1205
        %v1379 = vpop.f32.mrb[0].mxu0
        %v1380 = vadd.f32 %v851, %v1379
        %v1381 = vpop.f32.mrb[0].mxu0
        %v1382 = vpop.f32.mrb[0].mxu0
        %v1383 = vadd.f32 %v854, %v1382
        %v1384 = vpop.f32.mrb[0].mxu0
        %1385 = vmatprep.mubr.bf16.mxu0 0
        %1386 = vmatmul.mubr.bf16.gmra.mrb[0].mxu0 %v1206
        %v1387 = vpop.f32.mrb[0].mxu0
        %v1388 = vadd.f32 %v859, %v1387
        %v1389 = vpop.f32.mrb[0].mxu0
        %v1390 = vpop.f32.mrb[0].mxu0
        %v1391 = vadd.f32 %v862, %v1390
        %v1392 = vpop.f32.mrb[0].mxu0
        %1393 = vmatprep.mubr.bf16.mxu0 0
        %1394 = vmatmul.mubr.bf16.gmra.mrb[0].mxu0 %v1207
        %v1395 = vpop.f32.mrb[0].mxu0
        %v1396 = vadd.f32 %v867, %v1395
        %v1397 = vpop.f32.mrb[0].mxu0
        %v1398 = vpop.f32.mrb[0].mxu0
        %v1399 = vadd.f32 %v870, %v1398
        %v1400 = vpop.f32.mrb[0].mxu0
        %1401 = vmatprep.mubr.bf16.mxu0 0
        %1402 = vmatmul.mubr.bf16.gmra.mrb[0].mxu0 %v1208
        %v1403 = vpop.f32.mrb[0].mxu0
        %v1404 = vadd.f32 %v875, %v1403
        %v1405 = vpop.f32.mrb[0].mxu0
        %v1406 = vpop.f32.mrb[0].mxu0
        %v1407 = vadd.f32 %v878, %v1406
        %v1408 = vpop.f32.mrb[0].mxu0
        %1409 = vmatprep.mubr.bf16.mxu0 0
        %1410 = vmatmul.mubr.bf16.gmra.mrb[0].mxu0 %v1209
        %v1411 = vpop.f32.mrb[0].mxu0
        %v1412 = vadd.f32 %v883, %v1411
        %v1413 = vpop.f32.mrb[0].mxu0
        %v1414 = vpop.f32.mrb[0].mxu0
        %v1415 = vadd.f32 %v886, %v1414
        %v1416 = vpop.f32.mrb[0].mxu0
        %1417 = vmatprep.mubr.bf16.mxu0 0
        %1418 = vmatmul.mubr.bf16.gmra.mrb[0].mxu0 %v1210
        %v1419 = vpop.f32.mrb[0].mxu0
        %v1420 = vadd.f32 %v891, %v1419
        %v1421 = vpop.f32.mrb[0].mxu0
        %v1422 = vpop.f32.mrb[0].mxu0
        %v1423 = vadd.f32 %v894, %v1422
        %v1424 = vpop.f32.mrb[0].mxu0
        %1425 = vmatprep.mubr.bf16.mxu0 0
        %1426 = vmatmul.mubr.bf16.gmra.mrb[0].mxu0 %v1211
        %v1427 = vpop.f32.mrb[0].mxu0
        %v1428 = vadd.f32 %v899, %v1427
        %v1429 = vpop.f32.mrb[0].mxu0
        %v1430 = vpop.f32.mrb[0].mxu0
        %v1431 = vadd.f32 %v902, %v1430
        %v1432 = vpop.f32.mrb[0].mxu0
        %1433 = vmatprep.mubr.bf16.mxu0 0
        %1434 = vmatmul.mubr.bf16.gmra.mrb[0].mxu0 %v1212
        %v1435 = vpop.f32.mrb[0].mxu0
        %v1436 = vadd.f32 %v907, %v1435
        %v1437 = vpop.f32.mrb[0].mxu0
        %v1438 = vpop.f32.mrb[0].mxu0
        %v1439 = vadd.f32 %v910, %v1438
        %v1440 = vpop.f32.mrb[0].mxu0
        %1441 = vmatprep.mubr.bf16.mxu0 0
        %1442 = vmatmul.mubr.bf16.gmra.mrb[0].mxu0 %v1213
        %v1443 = vpop.f32.mrb[0].mxu0
        %v1444 = vadd.f32 %v915, %v1443
        %v1445 = vpop.f32.mrb[0].mxu0
        %v1446 = vpop.f32.mrb[0].mxu0
        %v1447 = vadd.f32 %v918, %v1446
        %v1448 = vpop.f32.mrb[0].mxu0
        %1449 = vmatprep.mubr.bf16.mxu0 0
        %1450 = vmatmul.mubr.bf16.gmra.mrb[0].mxu0 %v1214
        %v1451 = vpop.f32.mrb[0].mxu0
        %v1452 = vadd.f32 %v923, %v1451
        %v1453 = vpop.f32.mrb[0].mxu0
        %v1454 = vpop.f32.mrb[0].mxu0
        %v1455 = vadd.f32 %v926, %v1454
        %v1456 = vpop.f32.mrb[0].mxu0
        %1457 = vmatprep.mubr.bf16.mxu0 0
        %1458 = vmatmul.mubr.bf16.gmra.mrb[0].mxu0 %v1215
        %v1459 = vpop.f32.mrb[0].mxu0
        %v1460 = vadd.f32 %v931, %v1459
        %v1461 = vpop.f32.mrb[0].mxu0
        %v1462 = vpop.f32.mrb[0].mxu0
        %v1463 = vadd.f32 %v934, %v1462
        %v1464 = vpop.f32.mrb[0].mxu0
        %1465 = vmatprep.mubr.bf16.mxu0 0
        %1466 = vmatmul.mubr.bf16.gmra.mrb[0].mxu0 %v1216
        %v1467 = vpop.f32.mrb[0].mxu0
        %v1468 = vadd.f32 %v939, %v1467
        %v1469 = vpop.f32.mrb[0].mxu0
        %v1470 = vpop.f32.mrb[0].mxu0
        %v1471 = vadd.f32 %v942, %v1470
        %v1472 = vpop.f32.mrb[0].mxu0
        %1473 = vmatprep.mubr.bf16.mxu0 0
        %1474 = vmatmul.mubr.bf16.gmra.mrb[0].mxu0 %v1217
        %v1475 = vpop.f32.mrb[0].mxu0
        %v1476 = vadd.f32 %v947, %v1475
        %v1477 = vpop.f32.mrb[0].mxu0
        %v1478 = vpop.f32.mrb[0].mxu0
        %v1479 = vadd.f32 %v950, %v1478
        %v1480 = vpop.f32.mrb[0].mxu0
        %1481 = vmatprep.mubr.bf16.mxu0 0
        %1482 = vmatmul.mubr.bf16.gmra.mrb[0].mxu0 %v1218
        %v1483 = vpop.f32.mrb[0].mxu0
        %v1484 = vadd.f32 %v955, %v1483
        %v1485 = vpop.f32.mrb[0].mxu0
        %v1486 = vpop.f32.mrb[0].mxu0
        %v1487 = vadd.f32 %v958, %v1486
        %v1488 = vpop.f32.mrb[0].mxu0
        %1489 = vmatprep.mubr.bf16.mxu0 0
        %1490 = vmatmul.mubr.bf16.gmra.mrb[0].mxu0 %v1219
        %v1491 = vpop.f32.mrb[0].mxu0
        %v1492 = vadd.f32 %v963, %v1491
        %v1493 = vpop.f32.mrb[0].mxu0
        %v1494 = vpop.f32.mrb[0].mxu0
        %v1495 = vadd.f32 %v966, %v1494
        %v1496 = vpop.f32.mrb[0].mxu0
        %1497 = vmatprep.mubr.bf16.mxu0 0
        %1498 = vmatmul.mubr.bf16.gmra.mrb[0].mxu0 %v1220
        %v1499 = vpop.f32.mrb[0].mxu0
        %v1500 = vadd.f32 %v971, %v1499
        %v1501 = vpop.f32.mrb[0].mxu0
        %v1502 = vpop.f32.mrb[0].mxu0
        %v1503 = vadd.f32 %v974, %v1502
        %v1504 = vpop.f32.mrb[0].mxu0
        %1505 = vmatprep.mubr.bf16.mxu0 0
        %1506 = vmatmul.mubr.bf16.gmra.mrb[0].mxu0 %v1221
        %v1507 = vpop.f32.mrb[0].mxu0
        %v1508 = vadd.f32 %v979, %v1507
        %v1509 = vpop.f32.mrb[0].mxu0
        %v1510 = vpop.f32.mrb[0].mxu0
        %v1511 = vadd.f32 %v982, %v1510
        %v1512 = vpop.f32.mrb[0].mxu0
        %1513 = vmatprep.mubr.bf16.mxu0 0
        %1514 = vmatmul.mubr.bf16.gmra.mrb[0].mxu0 %v1222
        %v1515 = vpop.f32.mrb[0].mxu0
        %v1516 = vadd.f32 %v987, %v1515
        %v1517 = vpop.f32.mrb[0].mxu0
        %v1518 = vpop.f32.mrb[0].mxu0
        %v1519 = vadd.f32 %v990, %v1518
        %v1520 = vpop.f32.mrb[0].mxu0
        %1521 = vmatprep.mubr.bf16.mxu0 0
        %1522 = vmatmul.mubr.bf16.gmra.mrb[0].mxu0 %v1223
        %v1523 = vpop.f32.mrb[0].mxu0
        %v1524 = vadd.f32 %v995, %v1523
        %v1525 = vpop.f32.mrb[0].mxu0
        %v1526 = vpop.f32.mrb[0].mxu0
        %v1527 = vadd.f32 %v998, %v1526
        %v1528 = vpop.f32.mrb[0].mxu0
        %1529 = vmatprep.mubr.bf16.mxu0 0
        %1530 = vmatmul.mubr.bf16.gmra.mrb[0].mxu0 %v1224
        %v1531 = vpop.f32.mrb[0].mxu0
        %v1532 = vadd.f32 %v1003, %v1531
        %v1533 = vpop.f32.mrb[0].mxu0
        %v1534 = vpop.f32.mrb[0].mxu0
        %v1535 = vadd.f32 %v1006, %v1534
        %v1536 = vpop.f32.mrb[0].mxu0
        %1537 = vmatprep.mubr.bf16.mxu0 0
        %1538 = vmatmul.mubr.bf16.gmra.mrb[0].mxu0 %v1225
        %v1539 = vpop.f32.mrb[0].mxu0
        %v1540 = vadd.f32 %v1011, %v1539
        %v1541 = vpop.f32.mrb[0].mxu0
        %v1542 = vpop.f32.mrb[0].mxu0
        %v1543 = vadd.f32 %v1014, %v1542
        %v1544 = vpop.f32.mrb[0].mxu0
        %1545 = vmatprep.mubr.bf16.mxu0 0
        %1546 = vmatmul.mubr.bf16.gmra.mrb[0].mxu0 %v1226
        %v1547 = vpop.f32.mrb[0].mxu0
        %v1548 = vadd.f32 %v1019, %v1547
        %v1549 = vpop.f32.mrb[0].mxu0
        %v1550 = vpop.f32.mrb[0].mxu0
        %v1551 = vadd.f32 %v1022, %v1550
        %v1552 = vpop.f32.mrb[0].mxu0
        %1553 = vmatprep.mubr.bf16.mxu0 0
        %1554 = vmatmul.mubr.bf16.gmra.mrb[0].mxu0 %v1227
        %v1555 = vpop.f32.mrb[0].mxu0
        %v1556 = vadd.f32 %v1027, %v1555
        %v1557 = vpop.f32.mrb[0].mxu0
        %v1558 = vpop.f32.mrb[0].mxu0
        %v1559 = vadd.f32 %v1030, %v1558
        %v1560 = vpop.f32.mrb[0].mxu0
        %1561 = vmatprep.mubr.bf16.mxu0 0
        %1562 = vmatmul.mubr.bf16.gmra.mrb[0].mxu0 %v1228
        %v1563 = vpop.f32.mrb[0].mxu0
        %v1564 = vadd.f32 %v1035, %v1563
        %v1565 = vpop.f32.mrb[0].mxu0
        %v1566 = vpop.f32.mrb[0].mxu0
        %v1567 = vadd.f32 %v1038, %v1566
        %v1568 = vpop.f32.mrb[0].mxu0
        %1569 = vmatprep.mubr.bf16.mxu0 0
        %1570 = vmatmul.mubr.bf16.gmra.mrb[0].mxu0 %v1229
        %v1571 = vpop.f32.mrb[0].mxu0
        %v1572 = vadd.f32 %v1043, %v1571
        %v1573 = vpop.f32.mrb[0].mxu0
        %v1574 = vpop.f32.mrb[0].mxu0
        %v1575 = vadd.f32 %v1046, %v1574
        %v1576 = vpop.f32.mrb[0].mxu0
        %1577 = vmatprep.mubr.bf16.mxu0 0
        %1578 = vmatmul.mubr.bf16.gmra.mrb[0].mxu0 %v1230
        %v1579 = vpop.f32.mrb[0].mxu0
        %v1580 = vadd.f32 %v1051, %v1579
        %v1581 = vpop.f32.mrb[0].mxu0
        %v1582 = vpop.f32.mrb[0].mxu0
        %v1583 = vadd.f32 %v1054, %v1582
        %v1584 = vpop.f32.mrb[0].mxu0
        %1585 = vmatprep.mubr.bf16.mxu0 0
        %1586 = vmatmul.mubr.bf16.gmra.mrb[0].mxu0 %v1231
        %v1587 = vpop.f32.mrb[0].mxu0
        %v1588 = vadd.f32 %v1059, %v1587
        %v1589 = vpop.f32.mrb[0].mxu0
        %v1590 = vpop.f32.mrb[0].mxu0
        %v1591 = vadd.f32 %v1062, %v1590
        %v1592 = vpop.f32.mrb[0].mxu0
        %1593 = vmatprep.mubr.bf16.mxu0 0
        %1594 = vmatmul.mubr.bf16.gmra.mrb[0].mxu0 %v1232
        %v1595 = vpop.f32.mrb[0].mxu0
        %v1596 = vadd.f32 %v1067, %v1595
        %v1597 = vpop.f32.mrb[0].mxu0
        %v1598 = vpop.f32.mrb[0].mxu0
        %v1599 = vadd.f32 %v1070, %v1598
        %v1600 = vpop.f32.mrb[0].mxu0
        %1601 = vdwg.mxu0
        %v1602 = vld [vmem:[%s4] sm:$0x1]
        %v1604 = vlaneseq
        %v1605 = vshrl.u32 %v1604, 7
        %v1606 = vsub.s32 0, %v1605
        %v1607 = vrot.slane %v1602, %v1606
        %v1609 = vadd.f32 %v1348, %v1607
        %v1610 = vadd.f32 %v1351, %v1607
        %v1611 = vadd.f32 %v1356, %v1607
        %v1612 = vadd.f32 %v1359, %v1607
        %v1613 = vadd.f32 %v1364, %v1607
        %v1614 = vadd.f32 %v1367, %v1607
        %v1615 = vadd.f32 %v1372, %v1607
        %v1616 = vadd.f32 %v1375, %v1607
        %v1617 = vadd.f32 %v1380, %v1607
        %v1618 = vadd.f32 %v1383, %v1607
        %v1619 = vadd.f32 %v1388, %v1607
        %v1620 = vadd.f32 %v1391, %v1607
        %v1621 = vadd.f32 %v1396, %v1607
        %v1622 = vadd.f32 %v1399, %v1607
        %v1623 = vadd.f32 %v1404, %v1607
        %v1624 = vadd.f32 %v1407, %v1607
        %v1625 = vadd.f32 %v1412, %v1607
        %v1626 = vadd.f32 %v1415, %v1607
        %v1627 = vadd.f32 %v1420, %v1607
        %v1628 = vadd.f32 %v1423, %v1607
        %v1629 = vadd.f32 %v1428, %v1607
        %v1630 = vadd.f32 %v1431, %v1607
        %v1631 = vadd.f32 %v1436, %v1607
        %v1632 = vadd.f32 %v1439, %v1607
        %v1633 = vadd.f32 %v1444, %v1607
        %v1634 = vadd.f32 %v1447, %v1607
        %v1635 = vadd.f32 %v1452, %v1607
        %v1636 = vadd.f32 %v1455, %v1607
        %v1637 = vadd.f32 %v1460, %v1607
        %v1638 = vadd.f32 %v1463, %v1607
        %v1639 = vadd.f32 %v1468, %v1607
        %v1640 = vadd.f32 %v1471, %v1607
        %v1641 = vadd.f32 %v1476, %v1607
        %v1642 = vadd.f32 %v1479, %v1607
        %v1643 = vadd.f32 %v1484, %v1607
        %v1644 = vadd.f32 %v1487, %v1607
        %v1645 = vadd.f32 %v1492, %v1607
        %v1646 = vadd.f32 %v1495, %v1607
        %v1647 = vadd.f32 %v1500, %v1607
        %v1648 = vadd.f32 %v1503, %v1607
        %v1649 = vadd.f32 %v1508, %v1607
        %v1650 = vadd.f32 %v1511, %v1607
        %v1651 = vadd.f32 %v1516, %v1607
        %v1652 = vadd.f32 %v1519, %v1607
        %v1653 = vadd.f32 %v1524, %v1607
        %v1654 = vadd.f32 %v1527, %v1607
        %v1655 = vadd.f32 %v1532, %v1607
        %v1656 = vadd.f32 %v1535, %v1607
        %v1657 = vadd.f32 %v1540, %v1607
        %v1658 = vadd.f32 %v1543, %v1607
        %v1659 = vadd.f32 %v1548, %v1607
        %v1660 = vadd.f32 %v1551, %v1607
        %v1661 = vadd.f32 %v1556, %v1607
        %v1662 = vadd.f32 %v1559, %v1607
        %v1663 = vadd.f32 %v1564, %v1607
        %v1664 = vadd.f32 %v1567, %v1607
        %v1665 = vadd.f32 %v1572, %v1607
        %v1666 = vadd.f32 %v1575, %v1607
        %v1667 = vadd.f32 %v1580, %v1607
        %v1668 = vadd.f32 %v1583, %v1607
        %v1669 = vadd.f32 %v1588, %v1607
        %v1670 = vadd.f32 %v1591, %v1607
        %v1671 = vadd.f32 %v1596, %v1607
        %v1672 = vadd.f32 %v1599, %v1607
        %v1673 = vmul.f32 %v1609, 0.999995
        %v1674 = vmul.f32 %v1610, 0.999995
        %v1675 = vmul.f32 %v1611, 0.999995
        %v1676 = vmul.f32 %v1612, 0.999995
        %v1677 = vmul.f32 %v1613, 0.999995
        %v1678 = vmul.f32 %v1614, 0.999995
        %v1679 = vmul.f32 %v1615, 0.999995
        %v1680 = vmul.f32 %v1616, 0.999995
        %v1681 = vmul.f32 %v1617, 0.999995
        %v1682 = vmul.f32 %v1618, 0.999995
        %v1683 = vmul.f32 %v1619, 0.999995
        %v1684 = vmul.f32 %v1620, 0.999995
        %v1685 = vmul.f32 %v1621, 0.999995
        %v1686 = vmul.f32 %v1622, 0.999995
        %v1687 = vmul.f32 %v1623, 0.999995
        %v1688 = vmul.f32 %v1624, 0.999995
        %v1689 = vmul.f32 %v1625, 0.999995
        %v1690 = vmul.f32 %v1626, 0.999995
        %v1691 = vmul.f32 %v1627, 0.999995
        %v1692 = vmul.f32 %v1628, 0.999995
        %v1693 = vmul.f32 %v1629, 0.999995
        %v1694 = vmul.f32 %v1630, 0.999995
        %v1695 = vmul.f32 %v1631, 0.999995
        %v1696 = vmul.f32 %v1632, 0.999995
        %v1697 = vmul.f32 %v1633, 0.999995
        %v1698 = vmul.f32 %v1634, 0.999995
        %v1699 = vmul.f32 %v1635, 0.999995
        %v1700 = vmul.f32 %v1636, 0.999995
        %v1701 = vmul.f32 %v1637, 0.999995
        %v1702 = vmul.f32 %v1638, 0.999995
        %v1703 = vmul.f32 %v1639, 0.999995
        %v1704 = vmul.f32 %v1640, 0.999995
        %v1705 = vmul.f32 %v1641, 0.999995
        %v1706 = vmul.f32 %v1642, 0.999995
        %v1707 = vmul.f32 %v1643, 0.999995
        %v1708 = vmul.f32 %v1644, 0.999995
        %v1709 = vmul.f32 %v1645, 0.999995
        %v1710 = vmul.f32 %v1646, 0.999995
        %v1711 = vmul.f32 %v1647, 0.999995
        %v1712 = vmul.f32 %v1648, 0.999995
        %v1713 = vmul.f32 %v1649, 0.999995
        %v1714 = vmul.f32 %v1650, 0.999995
        %v1715 = vmul.f32 %v1651, 0.999995
        %v1716 = vmul.f32 %v1652, 0.999995
        %v1717 = vmul.f32 %v1653, 0.999995
        %v1718 = vmul.f32 %v1654, 0.999995
        %v1719 = vmul.f32 %v1655, 0.999995
        %v1720 = vmul.f32 %v1656, 0.999995
        %v1721 = vmul.f32 %v1657, 0.999995
        %v1722 = vmul.f32 %v1658, 0.999995
        %v1723 = vmul.f32 %v1659, 0.999995
        %v1724 = vmul.f32 %v1660, 0.999995
        %v1725 = vmul.f32 %v1661, 0.999995
        %v1726 = vmul.f32 %v1662, 0.999995
        %v1727 = vmul.f32 %v1663, 0.999995
        %v1728 = vmul.f32 %v1664, 0.999995
        %v1729 = vmul.f32 %v1665, 0.999995
        %v1730 = vmul.f32 %v1666, 0.999995
        %v1731 = vmul.f32 %v1667, 0.999995
        %v1732 = vmul.f32 %v1668, 0.999995
        %v1733 = vmul.f32 %v1669, 0.999995
        %v1734 = vmul.f32 %v1670, 0.999995
        %v1735 = vmul.f32 %v1671, 0.999995
        %v1736 = vmul.f32 %v1672, 0.999995
        %v1737 = vmax.f32 %v1673, 0.0
        %v1738 = vmax.f32 %v1674, 0.0
        %v1739 = vmax.f32 %v1675, 0.0
        %v1740 = vmax.f32 %v1676, 0.0
        %v1741 = vmax.f32 %v1677, 0.0
        %v1742 = vmax.f32 %v1678, 0.0
        %v1743 = vmax.f32 %v1679, 0.0
        %v1744 = vmax.f32 %v1680, 0.0
        %v1745 = vmax.f32 %v1681, 0.0
        %v1746 = vmax.f32 %v1682, 0.0
        %v1747 = vmax.f32 %v1683, 0.0
        %v1748 = vmax.f32 %v1684, 0.0
        %v1749 = vmax.f32 %v1685, 0.0
        %v1750 = vmax.f32 %v1686, 0.0
        %v1751 = vmax.f32 %v1687, 0.0
        %v1752 = vmax.f32 %v1688, 0.0
        %v1753 = vmax.f32 %v1689, 0.0
        %v1754 = vmax.f32 %v1690, 0.0
        %v1755 = vmax.f32 %v1691, 0.0
        %v1756 = vmax.f32 %v1692, 0.0
        %v1757 = vmax.f32 %v1693, 0.0
        %v1758 = vmax.f32 %v1694, 0.0
        %v1759 = vmax.f32 %v1695, 0.0
        %v1760 = vmax.f32 %v1696, 0.0
        %v1761 = vmax.f32 %v1697, 0.0
        %v1762 = vmax.f32 %v1698, 0.0
        %v1763 = vmax.f32 %v1699, 0.0
        %v1764 = vmax.f32 %v1700, 0.0
        %v1765 = vmax.f32 %v1701, 0.0
        %v1766 = vmax.f32 %v1702, 0.0
        %v1767 = vmax.f32 %v1703, 0.0
        %v1768 = vmax.f32 %v1704, 0.0
        %v1769 = vmax.f32 %v1705, 0.0
        %v1770 = vmax.f32 %v1706, 0.0
        %v1771 = vmax.f32 %v1707, 0.0
        %v1772 = vmax.f32 %v1708, 0.0
        %v1773 = vmax.f32 %v1709, 0.0
        %v1774 = vmax.f32 %v1710, 0.0
        %v1775 = vmax.f32 %v1711, 0.0
        %v1776 = vmax.f32 %v1712, 0.0
        %v1777 = vmax.f32 %v1713, 0.0
        %v1778 = vmax.f32 %v1714, 0.0
        %v1779 = vmax.f32 %v1715, 0.0
        %v1780 = vmax.f32 %v1716, 0.0
        %v1781 = vmax.f32 %v1717, 0.0
        %v1782 = vmax.f32 %v1718, 0.0
        %v1783 = vmax.f32 %v1719, 0.0
        %v1784 = vmax.f32 %v1720, 0.0
        %v1785 = vmax.f32 %v1721, 0.0
        %v1786 = vmax.f32 %v1722, 0.0
        %v1787 = vmax.f32 %v1723, 0.0
        %v1788 = vmax.f32 %v1724, 0.0
        %v1789 = vmax.f32 %v1725, 0.0
        %v1790 = vmax.f32 %v1726, 0.0
        %v1791 = vmax.f32 %v1727, 0.0
        %v1792 = vmax.f32 %v1728, 0.0
        %v1793 = vmax.f32 %v1729, 0.0
        %v1794 = vmax.f32 %v1730, 0.0
        %v1795 = vmax.f32 %v1731, 0.0
        %v1796 = vmax.f32 %v1732, 0.0
        %v1797 = vmax.f32 %v1733, 0.0
        %v1798 = vmax.f32 %v1734, 0.0
        %v1799 = vmax.f32 %v1735, 0.0
        %v1800 = vmax.f32 %v1736, 0.0
        %v1801 = vpack.c.bf16 %v1738, %v1737
        %v1802 = vpack.c.bf16 %v1740, %v1739
        %v1803 = vpack.c.bf16 %v1742, %v1741
        %v1804 = vpack.c.bf16 %v1744, %v1743
        %v1805 = vpack.c.bf16 %v1746, %v1745
        %v1806 = vpack.c.bf16 %v1748, %v1747
        %v1807 = vpack.c.bf16 %v1750, %v1749
        %v1808 = vpack.c.bf16 %v1752, %v1751
        %v1809 = vpack.c.bf16 %v1754, %v1753
        %v1810 = vpack.c.bf16 %v1756, %v1755
        %v1811 = vpack.c.bf16 %v1758, %v1757
        %v1812 = vpack.c.bf16 %v1760, %v1759
        %v1813 = vpack.c.bf16 %v1762, %v1761
        %v1814 = vpack.c.bf16 %v1764, %v1763
        %v1815 = vpack.c.bf16 %v1766, %v1765
        %v1816 = vpack.c.bf16 %v1768, %v1767
        %v1817 = vpack.c.bf16 %v1770, %v1769
        %v1818 = vpack.c.bf16 %v1772, %v1771
        %v1819 = vpack.c.bf16 %v1774, %v1773
        %v1820 = vpack.c.bf16 %v1776, %v1775
        %v1821 = vpack.c.bf16 %v1778, %v1777
        %v1822 = vpack.c.bf16 %v1780, %v1779
        %v1823 = vpack.c.bf16 %v1782, %v1781
        %v1824 = vpack.c.bf16 %v1784, %v1783
        %v1825 = vpack.c.bf16 %v1786, %v1785
        %v1826 = vpack.c.bf16 %v1788, %v1787
        %v1827 = vpack.c.bf16 %v1790, %v1789
        %v1828 = vpack.c.bf16 %v1792, %v1791
        %v1829 = vpack.c.bf16 %v1794, %v1793
        %v1830 = vpack.c.bf16 %v1796, %v1795
        %v1831 = vpack.c.bf16 %v1798, %v1797
        %v1832 = vpack.c.bf16 %v1800, %v1799
        %v1833 = vld [vmem:[#allocation10] sm:$0xf]
        %v1834 = vld [vmem:[#allocation10 + $0x4] sm:$0xf]
        %v1835 = vld [vmem:[#allocation10 + $0x8] sm:$0xf]
        %v1836 = vld [vmem:[#allocation10 + $0xc] sm:$0xf]
        %v1837 = vld [vmem:[#allocation10 + $0x10] sm:$0xf]
        %v1838 = vld [vmem:[#allocation10 + $0x14] sm:$0xf]
        %v1839 = vld [vmem:[#allocation10 + $0x18] sm:$0xf]
        %v1840 = vld [vmem:[#allocation10 + $0x1c] sm:$0xf]
        %v1841 = vld [vmem:[#allocation10 + $0x20] sm:$0xf]
        %v1842 = vld [vmem:[#allocation10 + $0x24] sm:$0xf]
        %v1843 = vld [vmem:[#allocation10 + $0x28] sm:$0xf]
        %v1844 = vld [vmem:[#allocation10 + $0x2c] sm:$0xf]
        %v1845 = vld [vmem:[#allocation10 + $0x30] sm:$0xf]
        %v1846 = vld [vmem:[#allocation10 + $0x34] sm:$0xf]
        %v1847 = vld [vmem:[#allocation10 + $0x38] sm:$0xf]
        %v1848 = vld [vmem:[#allocation10 + $0x3c] sm:$0xf]
        %v1849 = vld [vmem:[%s6] sm:$0x1]
        %v1851 = vlaneseq
        %v1852 = vshrl.u32 %v1851, 7
        %v1853 = vsub.s32 0, %v1852
        %v1854 = vrot.slane %v1849, %v1853
        %v1872 = vunpack.c.l.b16 %v1833
        %v1873 = vunpack.c.l.b16 %v1834
        %v1874 = vunpack.c.l.b16 %v1835
        %v1875 = vunpack.c.l.b16 %v1836
        %v1876 = vunpack.c.l.b16 %v1837
        %v1877 = vunpack.c.l.b16 %v1838
        %v1878 = vunpack.c.l.b16 %v1839
        %v1879 = vunpack.c.l.b16 %v1840
        %v1880 = vunpack.c.l.b16 %v1841
        %v1881 = vunpack.c.l.b16 %v1842
        %v1882 = vunpack.c.l.b16 %v1843
        %v1883 = vunpack.c.l.b16 %v1844
        %v1884 = vunpack.c.l.b16 %v1845
        %v1885 = vunpack.c.l.b16 %v1846
        %v1886 = vunpack.c.l.b16 %v1847
        %v1887 = vunpack.c.l.b16 %v1848
        %v1888 = vpack.c.b16 %v1873, %v1872
        %v1889 = vpack.c.b16 %v1875, %v1874
        %v1890 = vpack.c.b16 %v1877, %v1876
        %v1891 = vpack.c.b16 %v1879, %v1878
        %v1892 = vpack.c.b16 %v1881, %v1880
        %v1893 = vpack.c.b16 %v1883, %v1882
        %v1894 = vpack.c.b16 %v1885, %v1884
        %v1895 = vpack.c.b16 %v1887, %v1886
        %1904 = vmatprep.subr.bf16.mxu0 0
        %1905 = vmatpush1.bf16.msra.mxu0 %v1888
        %1906 = vmatprep.subr.bf16.mxu0 0
        %1907 = vmatpush1.bf16.msra.mxu0 %v1889
        %1908 = vmatprep.subr.bf16.mxu0 0
        %1909 = vmatpush1.bf16.msra.mxu0 %v1890
        %1910 = vmatprep.subr.bf16.mxu0 0
        %1911 = vmatpush1.bf16.msra.mxu0 %v1891
        %1912 = vmatprep.subr.bf16.mxu0 0
        %1913 = vmatpush1.bf16.msra.mxu0 %v1892
        %1914 = vmatprep.subr.bf16.mxu0 0
        %1915 = vmatpush1.bf16.msra.mxu0 %v1893
        %1916 = vmatprep.subr.bf16.mxu0 0
        %1917 = vmatpush1.bf16.msra.mxu0 %v1894
        %1918 = vmatprep.subr.bf16.mxu0 0
        %1919 = vmatpush1.bf16.msra.mxu0 %v1895
        %1920 = vmatprep.subr.bf16.mxu0 0
        %1921 = vmatpush1.bf16.msra.mxu0 0
        %1922 = vmatprep.subr.bf16.mxu0 0
        %1923 = vmatpush1.bf16.msra.mxu0 0
        %1924 = vmatprep.subr.bf16.mxu0 0
        %1925 = vmatpush1.bf16.msra.mxu0 0
        %1926 = vmatprep.subr.bf16.mxu0 0
        %1927 = vmatpush1.bf16.msra.mxu0 0
        %1928 = vmatprep.subr.bf16.mxu0 0
        %1929 = vmatpush1.bf16.msra.mxu0 0
        %1930 = vmatprep.subr.bf16.mxu0 0
        %1931 = vmatpush1.bf16.msra.mxu0 0
        %1932 = vmatprep.subr.bf16.mxu0 0
        %1933 = vmatpush1.bf16.msra.mxu0 0
        %1934 = vmatprep.subr.bf16.mxu0 0
        %1935 = vmatpush1.bf16.msra.mxu0 0
        %1936 = vmatprep.mubr.bf16.mxu0 0
        %1937 = vmatmul.mubr.bf16.gmra.mrb[0].mxu0 %v1801
        %v1938 = vpop.f32.mrb[0].mxu0
        %v1939 = vadd.f32 %v1854, %v1938
        %v1940 = vpop.f32.mrb[0].mxu0
        %v1941 = vpop.f32.mrb[0].mxu0
        %v1942 = vadd.f32 %v1854, %v1941
        %v1943 = vpop.f32.mrb[0].mxu0
        %1944 = vmatprep.mubr.bf16.mxu0 0
        %1945 = vmatmul.mubr.bf16.gmra.mrb[0].mxu0 %v1802
        %v1946 = vpop.f32.mrb[0].mxu0
        %v1947 = vadd.f32 %v1854, %v1946
        %v1948 = vpop.f32.mrb[0].mxu0
        %v1949 = vpop.f32.mrb[0].mxu0
        %v1950 = vadd.f32 %v1854, %v1949
        %v1951 = vpop.f32.mrb[0].mxu0
        %1952 = vmatprep.mubr.bf16.mxu0 0
        %1953 = vmatmul.mubr.bf16.gmra.mrb[0].mxu0 %v1803
        %v1954 = vpop.f32.mrb[0].mxu0
        %v1955 = vadd.f32 %v1854, %v1954
        %v1956 = vpop.f32.mrb[0].mxu0
        %v1957 = vpop.f32.mrb[0].mxu0
        %v1958 = vadd.f32 %v1854, %v1957
        %v1959 = vpop.f32.mrb[0].mxu0
        %1960 = vmatprep.mubr.bf16.mxu0 0
        %1961 = vmatmul.mubr.bf16.gmra.mrb[0].mxu0 %v1804
        %v1962 = vpop.f32.mrb[0].mxu0
        %v1963 = vadd.f32 %v1854, %v1962
        %v1964 = vpop.f32.mrb[0].mxu0
        %v1965 = vpop.f32.mrb[0].mxu0
        %v1966 = vadd.f32 %v1854, %v1965
        %v1967 = vpop.f32.mrb[0].mxu0
        %1968 = vmatprep.mubr.bf16.mxu0 0
        %1969 = vmatmul.mubr.bf16.gmra.mrb[0].mxu0 %v1805
        %v1970 = vpop.f32.mrb[0].mxu0
        %v1971 = vadd.f32 %v1854, %v1970
        %v1972 = vpop.f32.mrb[0].mxu0
        %v1973 = vpop.f32.mrb[0].mxu0
        %v1974 = vadd.f32 %v1854, %v1973
        %v1975 = vpop.f32.mrb[0].mxu0
        %1976 = vmatprep.mubr.bf16.mxu0 0
        %1977 = vmatmul.mubr.bf16.gmra.mrb[0].mxu0 %v1806
        %v1978 = vpop.f32.mrb[0].mxu0
        %v1979 = vadd.f32 %v1854, %v1978
        %v1980 = vpop.f32.mrb[0].mxu0
        %v1981 = vpop.f32.mrb[0].mxu0
        %v1982 = vadd.f32 %v1854, %v1981
        %v1983 = vpop.f32.mrb[0].mxu0
        %1984 = vmatprep.mubr.bf16.mxu0 0
        %1985 = vmatmul.mubr.bf16.gmra.mrb[0].mxu0 %v1807
        %v1986 = vpop.f32.mrb[0].mxu0
        %v1987 = vadd.f32 %v1854, %v1986
        %v1988 = vpop.f32.mrb[0].mxu0
        %v1989 = vpop.f32.mrb[0].mxu0
        %v1990 = vadd.f32 %v1854, %v1989
        %v1991 = vpop.f32.mrb[0].mxu0
        %1992 = vmatprep.mubr.bf16.mxu0 0
        %1993 = vmatmul.mubr.bf16.gmra.mrb[0].mxu0 %v1808
        %v1994 = vpop.f32.mrb[0].mxu0
        %v1995 = vadd.f32 %v1854, %v1994
        %v1996 = vpop.f32.mrb[0].mxu0
        %v1997 = vpop.f32.mrb[0].mxu0
        %v1998 = vadd.f32 %v1854, %v1997
        %v1999 = vpop.f32.mrb[0].mxu0
        %2000 = vmatprep.mubr.bf16.mxu0 0
        %2001 = vmatmul.mubr.bf16.gmra.mrb[0].mxu0 %v1809
        %v2002 = vpop.f32.mrb[0].mxu0
        %v2003 = vadd.f32 %v1854, %v2002
        %v2004 = vpop.f32.mrb[0].mxu0
        %v2005 = vpop.f32.mrb[0].mxu0
        %v2006 = vadd.f32 %v1854, %v2005
        %v2007 = vpop.f32.mrb[0].mxu0
        %2008 = vmatprep.mubr.bf16.mxu0 0
        %2009 = vmatmul.mubr.bf16.gmra.mrb[0].mxu0 %v1810
        %v2010 = vpop.f32.mrb[0].mxu0
        %v2011 = vadd.f32 %v1854, %v2010
        %v2012 = vpop.f32.mrb[0].mxu0
        %v2013 = vpop.f32.mrb[0].mxu0
        %v2014 = vadd.f32 %v1854, %v2013
        %v2015 = vpop.f32.mrb[0].mxu0
        %2016 = vmatprep.mubr.bf16.mxu0 0
        %2017 = vmatmul.mubr.bf16.gmra.mrb[0].mxu0 %v1811
        %v2018 = vpop.f32.mrb[0].mxu0
        %v2019 = vadd.f32 %v1854, %v2018
        %v2020 = vpop.f32.mrb[0].mxu0
        %v2021 = vpop.f32.mrb[0].mxu0
        %v2022 = vadd.f32 %v1854, %v2021
        %v2023 = vpop.f32.mrb[0].mxu0
        %2024 = vmatprep.mubr.bf16.mxu0 0
        %2025 = vmatmul.mubr.bf16.gmra.mrb[0].mxu0 %v1812
        %v2026 = vpop.f32.mrb[0].mxu0
        %v2027 = vadd.f32 %v1854, %v2026
        %v2028 = vpop.f32.mrb[0].mxu0
        %v2029 = vpop.f32.mrb[0].mxu0
        %v2030 = vadd.f32 %v1854, %v2029
        %v2031 = vpop.f32.mrb[0].mxu0
        %2032 = vmatprep.mubr.bf16.mxu0 0
        %2033 = vmatmul.mubr.bf16.gmra.mrb[0].mxu0 %v1813
        %v2034 = vpop.f32.mrb[0].mxu0
        %v2035 = vadd.f32 %v1854, %v2034
        %v2036 = vpop.f32.mrb[0].mxu0
        %v2037 = vpop.f32.mrb[0].mxu0
        %v2038 = vadd.f32 %v1854, %v2037
        %v2039 = vpop.f32.mrb[0].mxu0
        %2040 = vmatprep.mubr.bf16.mxu0 0
        %2041 = vmatmul.mubr.bf16.gmra.mrb[0].mxu0 %v1814
        %v2042 = vpop.f32.mrb[0].mxu0
        %v2043 = vadd.f32 %v1854, %v2042
        %v2044 = vpop.f32.mrb[0].mxu0
        %v2045 = vpop.f32.mrb[0].mxu0
        %v2046 = vadd.f32 %v1854, %v2045
        %v2047 = vpop.f32.mrb[0].mxu0
        %2048 = vmatprep.mubr.bf16.mxu0 0
        %2049 = vmatmul.mubr.bf16.gmra.mrb[0].mxu0 %v1815
        %v2050 = vpop.f32.mrb[0].mxu0
        %v2051 = vadd.f32 %v1854, %v2050
        %v2052 = vpop.f32.mrb[0].mxu0
        %v2053 = vpop.f32.mrb[0].mxu0
        %v2054 = vadd.f32 %v1854, %v2053
        %v2055 = vpop.f32.mrb[0].mxu0
        %2056 = vmatprep.mubr.bf16.mxu0 0
        %2057 = vmatmul.mubr.bf16.gmra.mrb[0].mxu0 %v1816
        %v2058 = vpop.f32.mrb[0].mxu0
        %v2059 = vadd.f32 %v1854, %v2058
        %v2060 = vpop.f32.mrb[0].mxu0
        %v2061 = vpop.f32.mrb[0].mxu0
        %v2062 = vadd.f32 %v1854, %v2061
        %v2063 = vpop.f32.mrb[0].mxu0
        %2064 = vmatprep.mubr.bf16.mxu0 0
        %2065 = vmatmul.mubr.bf16.gmra.mrb[0].mxu0 %v1817
        %v2066 = vpop.f32.mrb[0].mxu0
        %v2067 = vadd.f32 %v1854, %v2066
        %v2068 = vpop.f32.mrb[0].mxu0
        %v2069 = vpop.f32.mrb[0].mxu0
        %v2070 = vadd.f32 %v1854, %v2069
        %v2071 = vpop.f32.mrb[0].mxu0
        %2072 = vmatprep.mubr.bf16.mxu0 0
        %2073 = vmatmul.mubr.bf16.gmra.mrb[0].mxu0 %v1818
        %v2074 = vpop.f32.mrb[0].mxu0
        %v2075 = vadd.f32 %v1854, %v2074
        %v2076 = vpop.f32.mrb[0].mxu0
        %v2077 = vpop.f32.mrb[0].mxu0
        %v2078 = vadd.f32 %v1854, %v2077
        %v2079 = vpop.f32.mrb[0].mxu0
        %2080 = vmatprep.mubr.bf16.mxu0 0
        %2081 = vmatmul.mubr.bf16.gmra.mrb[0].mxu0 %v1819
        %v2082 = vpop.f32.mrb[0].mxu0
        %v2083 = vadd.f32 %v1854, %v2082
        %v2084 = vpop.f32.mrb[0].mxu0
        %v2085 = vpop.f32.mrb[0].mxu0
        %v2086 = vadd.f32 %v1854, %v2085
        %v2087 = vpop.f32.mrb[0].mxu0
        %2088 = vmatprep.mubr.bf16.mxu0 0
        %2089 = vmatmul.mubr.bf16.gmra.mrb[0].mxu0 %v1820
        %v2090 = vpop.f32.mrb[0].mxu0
        %v2091 = vadd.f32 %v1854, %v2090
        %v2092 = vpop.f32.mrb[0].mxu0
        %v2093 = vpop.f32.mrb[0].mxu0
        %v2094 = vadd.f32 %v1854, %v2093
        %v2095 = vpop.f32.mrb[0].mxu0
        %2096 = vmatprep.mubr.bf16.mxu0 0
        %2097 = vmatmul.mubr.bf16.gmra.mrb[0].mxu0 %v1821
        %v2098 = vpop.f32.mrb[0].mxu0
        %v2099 = vadd.f32 %v1854, %v2098
        %v2100 = vpop.f32.mrb[0].mxu0
        %v2101 = vpop.f32.mrb[0].mxu0
        %v2102 = vadd.f32 %v1854, %v2101
        %v2103 = vpop.f32.mrb[0].mxu0
        %2104 = vmatprep.mubr.bf16.mxu0 0
        %2105 = vmatmul.mubr.bf16.gmra.mrb[0].mxu0 %v1822
        %v2106 = vpop.f32.mrb[0].mxu0
        %v2107 = vadd.f32 %v1854, %v2106
        %v2108 = vpop.f32.mrb[0].mxu0
        %v2109 = vpop.f32.mrb[0].mxu0
        %v2110 = vadd.f32 %v1854, %v2109
        %v2111 = vpop.f32.mrb[0].mxu0
        %2112 = vmatprep.mubr.bf16.mxu0 0
        %2113 = vmatmul.mubr.bf16.gmra.mrb[0].mxu0 %v1823
        %v2114 = vpop.f32.mrb[0].mxu0
        %v2115 = vadd.f32 %v1854, %v2114
        %v2116 = vpop.f32.mrb[0].mxu0
        %v2117 = vpop.f32.mrb[0].mxu0
        %v2118 = vadd.f32 %v1854, %v2117
        %v2119 = vpop.f32.mrb[0].mxu0
        %2120 = vmatprep.mubr.bf16.mxu0 0
        %2121 = vmatmul.mubr.bf16.gmra.mrb[0].mxu0 %v1824
        %v2122 = vpop.f32.mrb[0].mxu0
        %v2123 = vadd.f32 %v1854, %v2122
        %v2124 = vpop.f32.mrb[0].mxu0
        %v2125 = vpop.f32.mrb[0].mxu0
        %v2126 = vadd.f32 %v1854, %v2125
        %v2127 = vpop.f32.mrb[0].mxu0
        %2128 = vmatprep.mubr.bf16.mxu0 0
        %2129 = vmatmul.mubr.bf16.gmra.mrb[0].mxu0 %v1825
        %v2130 = vpop.f32.mrb[0].mxu0
        %v2131 = vadd.f32 %v1854, %v2130
        %v2132 = vpop.f32.mrb[0].mxu0
        %v2133 = vpop.f32.mrb[0].mxu0
        %v2134 = vadd.f32 %v1854, %v2133
        %v2135 = vpop.f32.mrb[0].mxu0
        %2136 = vmatprep.mubr.bf16.mxu0 0
        %2137 = vmatmul.mubr.bf16.gmra.mrb[0].mxu0 %v1826
        %v2138 = vpop.f32.mrb[0].mxu0
        %v2139 = vadd.f32 %v1854, %v2138
        %v2140 = vpop.f32.mrb[0].mxu0
        %v2141 = vpop.f32.mrb[0].mxu0
        %v2142 = vadd.f32 %v1854, %v2141
        %v2143 = vpop.f32.mrb[0].mxu0
        %2144 = vmatprep.mubr.bf16.mxu0 0
        %2145 = vmatmul.mubr.bf16.gmra.mrb[0].mxu0 %v1827
        %v2146 = vpop.f32.mrb[0].mxu0
        %v2147 = vadd.f32 %v1854, %v2146
        %v2148 = vpop.f32.mrb[0].mxu0
        %v2149 = vpop.f32.mrb[0].mxu0
        %v2150 = vadd.f32 %v1854, %v2149
        %v2151 = vpop.f32.mrb[0].mxu0
        %2152 = vmatprep.mubr.bf16.mxu0 0
        %2153 = vmatmul.mubr.bf16.gmra.mrb[0].mxu0 %v1828
        %v2154 = vpop.f32.mrb[0].mxu0
        %v2155 = vadd.f32 %v1854, %v2154
        %v2156 = vpop.f32.mrb[0].mxu0
        %v2157 = vpop.f32.mrb[0].mxu0
        %v2158 = vadd.f32 %v1854, %v2157
        %v2159 = vpop.f32.mrb[0].mxu0
        %2160 = vmatprep.mubr.bf16.mxu0 0
        %2161 = vmatmul.mubr.bf16.gmra.mrb[0].mxu0 %v1829
        %v2162 = vpop.f32.mrb[0].mxu0
        %v2163 = vadd.f32 %v1854, %v2162
        %v2164 = vpop.f32.mrb[0].mxu0
        %v2165 = vpop.f32.mrb[0].mxu0
        %v2166 = vadd.f32 %v1854, %v2165
        %v2167 = vpop.f32.mrb[0].mxu0
        %2168 = vmatprep.mubr.bf16.mxu0 0
        %2169 = vmatmul.mubr.bf16.gmra.mrb[0].mxu0 %v1830
        %v2170 = vpop.f32.mrb[0].mxu0
        %v2171 = vadd.f32 %v1854, %v2170
        %v2172 = vpop.f32.mrb[0].mxu0
        %v2173 = vpop.f32.mrb[0].mxu0
        %v2174 = vadd.f32 %v1854, %v2173
        %v2175 = vpop.f32.mrb[0].mxu0
        %2176 = vmatprep.mubr.bf16.mxu0 0
        %2177 = vmatmul.mubr.bf16.gmra.mrb[0].mxu0 %v1831
        %v2178 = vpop.f32.mrb[0].mxu0
        %v2179 = vadd.f32 %v1854, %v2178
        %v2180 = vpop.f32.mrb[0].mxu0
        %v2181 = vpop.f32.mrb[0].mxu0
        %v2182 = vadd.f32 %v1854, %v2181
        %v2183 = vpop.f32.mrb[0].mxu0
        %2184 = vmatprep.mubr.bf16.mxu0 0
        %2185 = vmatmul.mubr.bf16.gmra.mrb[0].mxu0 %v1832
        %v2186 = vpop.f32.mrb[0].mxu0
        %v2187 = vadd.f32 %v1854, %v2186
        %v2188 = vpop.f32.mrb[0].mxu0
        %v2189 = vpop.f32.mrb[0].mxu0
        %v2190 = vadd.f32 %v1854, %v2189
        %v2191 = vpop.f32.mrb[0].mxu0
        %2192 = vdwg.mxu0
        %v2193 = vpack.c.bf16 %v1942, %v1939
        %v2194 = vpack.c.bf16 %v1950, %v1947
        %v2195 = vpack.c.bf16 %v1958, %v1955
        %v2196 = vpack.c.bf16 %v1966, %v1963
        %v2197 = vpack.c.bf16 %v1974, %v1971
        %v2198 = vpack.c.bf16 %v1982, %v1979
        %v2199 = vpack.c.bf16 %v1990, %v1987
        %v2200 = vpack.c.bf16 %v1998, %v1995
        %v2201 = vpack.c.bf16 %v2006, %v2003
        %v2202 = vpack.c.bf16 %v2014, %v2011
        %v2203 = vpack.c.bf16 %v2022, %v2019
        %v2204 = vpack.c.bf16 %v2030, %v2027
        %v2205 = vpack.c.bf16 %v2038, %v2035
        %v2206 = vpack.c.bf16 %v2046, %v2043
        %v2207 = vpack.c.bf16 %v2054, %v2051
        %v2208 = vpack.c.bf16 %v2062, %v2059
        %v2209 = vpack.c.bf16 %v2070, %v2067
        %v2210 = vpack.c.bf16 %v2078, %v2075
        %v2211 = vpack.c.bf16 %v2086, %v2083
        %v2212 = vpack.c.bf16 %v2094, %v2091
        %v2213 = vpack.c.bf16 %v2102, %v2099
        %v2214 = vpack.c.bf16 %v2110, %v2107
        %v2215 = vpack.c.bf16 %v2118, %v2115
        %v2216 = vpack.c.bf16 %v2126, %v2123
        %v2217 = vpack.c.bf16 %v2134, %v2131
        %v2218 = vpack.c.bf16 %v2142, %v2139
        %v2219 = vpack.c.bf16 %v2150, %v2147
        %v2220 = vpack.c.bf16 %v2158, %v2155
        %v2221 = vpack.c.bf16 %v2166, %v2163
        %v2222 = vpack.c.bf16 %v2174, %v2171
        %v2223 = vpack.c.bf16 %v2182, %v2179
        %v2224 = vpack.c.bf16 %v2190, %v2187
        %v2257 = vunpack.c.l.b16 %v2193
        %v2258 = vunpack.c.h.b16 %v2193
        %v2259 = vunpack.c.l.b16 %v2194
        %v2260 = vunpack.c.h.b16 %v2194
        %v2261 = vunpack.c.l.b16 %v2195
        %v2262 = vunpack.c.h.b16 %v2195
        %v2263 = vunpack.c.l.b16 %v2196
        %v2264 = vunpack.c.h.b16 %v2196
        %v2265 = vunpack.c.l.b16 %v2197
        %v2266 = vunpack.c.h.b16 %v2197
        %v2267 = vunpack.c.l.b16 %v2198
        %v2268 = vunpack.c.h.b16 %v2198
        %v2269 = vunpack.c.l.b16 %v2199
        %v2270 = vunpack.c.h.b16 %v2199
        %v2271 = vunpack.c.l.b16 %v2200
        %v2272 = vunpack.c.h.b16 %v2200
        %v2273 = vunpack.c.l.b16 %v2201
        %v2274 = vunpack.c.h.b16 %v2201
        %v2275 = vunpack.c.l.b16 %v2202
        %v2276 = vunpack.c.h.b16 %v2202
        %v2277 = vunpack.c.l.b16 %v2203
        %v2278 = vunpack.c.h.b16 %v2203
        %v2279 = vunpack.c.l.b16 %v2204
        %v2280 = vunpack.c.h.b16 %v2204
        %v2281 = vunpack.c.l.b16 %v2205
        %v2282 = vunpack.c.h.b16 %v2205
        %v2283 = vunpack.c.l.b16 %v2206
        %v2284 = vunpack.c.h.b16 %v2206
        %v2285 = vunpack.c.l.b16 %v2207
        %v2286 = vunpack.c.h.b16 %v2207
        %v2287 = vunpack.c.l.b16 %v2208
        %v2288 = vunpack.c.h.b16 %v2208
        %v2289 = vunpack.c.l.b16 %v2209
        %v2290 = vunpack.c.h.b16 %v2209
        %v2291 = vunpack.c.l.b16 %v2210
        %v2292 = vunpack.c.h.b16 %v2210
        %v2293 = vunpack.c.l.b16 %v2211
        %v2294 = vunpack.c.h.b16 %v2211
        %v2295 = vunpack.c.l.b16 %v2212
        %v2296 = vunpack.c.h.b16 %v2212
        %v2297 = vunpack.c.l.b16 %v2213
        %v2298 = vunpack.c.h.b16 %v2213
        %v2299 = vunpack.c.l.b16 %v2214
        %v2300 = vunpack.c.h.b16 %v2214
        %v2301 = vunpack.c.l.b16 %v2215
        %v2302 = vunpack.c.h.b16 %v2215
        %v2303 = vunpack.c.l.b16 %v2216
        %v2304 = vunpack.c.h.b16 %v2216
        %v2305 = vunpack.c.l.b16 %v2217
        %v2306 = vunpack.c.h.b16 %v2217
        %v2307 = vunpack.c.l.b16 %v2218
        %v2308 = vunpack.c.h.b16 %v2218
        %v2309 = vunpack.c.l.b16 %v2219
        %v2310 = vunpack.c.h.b16 %v2219
        %v2311 = vunpack.c.l.b16 %v2220
        %v2312 = vunpack.c.h.b16 %v2220
        %v2313 = vunpack.c.l.b16 %v2221
        %v2314 = vunpack.c.h.b16 %v2221
        %v2315 = vunpack.c.l.b16 %v2222
        %v2316 = vunpack.c.h.b16 %v2222
        %v2317 = vunpack.c.l.b16 %v2223
        %v2318 = vunpack.c.h.b16 %v2223
        %v2319 = vunpack.c.l.b16 %v2224
        %v2320 = vunpack.c.h.b16 %v2224
        %v2321 = vpack.c.b16 %v2257, %v2257
        %v2322 = vpack.c.b16 %v2258, %v2258
        %v2323 = vpack.c.b16 %v2259, %v2259
        %v2324 = vpack.c.b16 %v2260, %v2260
        %v2325 = vpack.c.b16 %v2261, %v2261
        %v2326 = vpack.c.b16 %v2262, %v2262
        %v2327 = vpack.c.b16 %v2263, %v2263
        %v2328 = vpack.c.b16 %v2264, %v2264
        %v2329 = vpack.c.b16 %v2265, %v2265
        %v2330 = vpack.c.b16 %v2266, %v2266
        %v2331 = vpack.c.b16 %v2267, %v2267
        %v2332 = vpack.c.b16 %v2268, %v2268
        %v2333 = vpack.c.b16 %v2269, %v2269
        %v2334 = vpack.c.b16 %v2270, %v2270
        %v2335 = vpack.c.b16 %v2271, %v2271
        %v2336 = vpack.c.b16 %v2272, %v2272
        %v2337 = vpack.c.b16 %v2273, %v2273
        %v2338 = vpack.c.b16 %v2274, %v2274
        %v2339 = vpack.c.b16 %v2275, %v2275
        %v2340 = vpack.c.b16 %v2276, %v2276
        %v2341 = vpack.c.b16 %v2277, %v2277
        %v2342 = vpack.c.b16 %v2278, %v2278
        %v2343 = vpack.c.b16 %v2279, %v2279
        %v2344 = vpack.c.b16 %v2280, %v2280
        %v2345 = vpack.c.b16 %v2281, %v2281
        %v2346 = vpack.c.b16 %v2282, %v2282
        %v2347 = vpack.c.b16 %v2283, %v2283
        %v2348 = vpack.c.b16 %v2284, %v2284
        %v2349 = vpack.c.b16 %v2285, %v2285
        %v2350 = vpack.c.b16 %v2286, %v2286
        %v2351 = vpack.c.b16 %v2287, %v2287
        %v2352 = vpack.c.b16 %v2288, %v2288
        %v2353 = vpack.c.b16 %v2289, %v2289
        %v2354 = vpack.c.b16 %v2290, %v2290
        %v2355 = vpack.c.b16 %v2291, %v2291
        %v2356 = vpack.c.b16 %v2292, %v2292
        %v2357 = vpack.c.b16 %v2293, %v2293
        %v2358 = vpack.c.b16 %v2294, %v2294
        %v2359 = vpack.c.b16 %v2295, %v2295
        %v2360 = vpack.c.b16 %v2296, %v2296
        %v2361 = vpack.c.b16 %v2297, %v2297
        %v2362 = vpack.c.b16 %v2298, %v2298
        %v2363 = vpack.c.b16 %v2299, %v2299
        %v2364 = vpack.c.b16 %v2300, %v2300
        %v2365 = vpack.c.b16 %v2301, %v2301
        %v2366 = vpack.c.b16 %v2302, %v2302
        %v2367 = vpack.c.b16 %v2303, %v2303
        %v2368 = vpack.c.b16 %v2304, %v2304
        %v2369 = vpack.c.b16 %v2305, %v2305
        %v2370 = vpack.c.b16 %v2306, %v2306
        %v2371 = vpack.c.b16 %v2307, %v2307
        %v2372 = vpack.c.b16 %v2308, %v2308
        %v2373 = vpack.c.b16 %v2309, %v2309
        %v2374 = vpack.c.b16 %v2310, %v2310
        %v2375 = vpack.c.b16 %v2311, %v2311
        %v2376 = vpack.c.b16 %v2312, %v2312
        %v2377 = vpack.c.b16 %v2313, %v2313
        %v2378 = vpack.c.b16 %v2314, %v2314
        %v2379 = vpack.c.b16 %v2315, %v2315
        %v2380 = vpack.c.b16 %v2316, %v2316
        %v2381 = vpack.c.b16 %v2317, %v2317
        %v2382 = vpack.c.b16 %v2318, %v2318
        %v2383 = vpack.c.b16 %v2319, %v2319
        %v2384 = vpack.c.b16 %v2320, %v2320
        %2449 = vst [vmem:[%s379] sm:$0xf] %v2321
        %2450 = vst [vmem:[%s379 + $0x4] sm:$0xf] %v2322
        %2451 = vst [vmem:[%s379 + $0x8] sm:$0xf] %v2323
        %2452 = vst [vmem:[%s379 + $0xc] sm:$0xf] %v2324
        %2453 = vst [vmem:[%s379 + $0x10] sm:$0xf] %v2325
        %2454 = vst [vmem:[%s379 + $0x14] sm:$0xf] %v2326
        %2455 = vst [vmem:[%s379 + $0x18] sm:$0xf] %v2327
        %2456 = vst [vmem:[%s379 + $0x1c] sm:$0xf] %v2328
        %2457 = vst [vmem:[%s379 + $0x20] sm:$0xf] %v2329
        %2458 = vst [vmem:[%s379 + $0x24] sm:$0xf] %v2330
        %2459 = vst [vmem:[%s379 + $0x28] sm:$0xf] %v2331
        %2460 = vst [vmem:[%s379 + $0x2c] sm:$0xf] %v2332
        %2461 = vst [vmem:[%s379 + $0x30] sm:$0xf] %v2333
        %2462 = vst [vmem:[%s379 + $0x34] sm:$0xf] %v2334
        %2463 = vst [vmem:[%s379 + $0x38] sm:$0xf] %v2335
        %2464 = vst [vmem:[%s379 + $0x3c] sm:$0xf] %v2336
        %2465 = vst [vmem:[%s379 + $0x40] sm:$0xf] %v2337
        %2466 = vst [vmem:[%s379 + $0x44] sm:$0xf] %v2338
        %2467 = vst [vmem:[%s379 + $0x48] sm:$0xf] %v2339
        %2468 = vst [vmem:[%s379 + $0x4c] sm:$0xf] %v2340
        %2469 = vst [vmem:[%s379 + $0x50] sm:$0xf] %v2341
        %2470 = vst [vmem:[%s379 + $0x54] sm:$0xf] %v2342
        %2471 = vst [vmem:[%s379 + $0x58] sm:$0xf] %v2343
        %2472 = vst [vmem:[%s379 + $0x5c] sm:$0xf] %v2344
        %2473 = vst [vmem:[%s379 + $0x60] sm:$0xf] %v2345
        %2474 = vst [vmem:[%s379 + $0x64] sm:$0xf] %v2346
        %2475 = vst [vmem:[%s379 + $0x68] sm:$0xf] %v2347
        %2476 = vst [vmem:[%s379 + $0x6c] sm:$0xf] %v2348
        %2477 = vst [vmem:[%s379 + $0x70] sm:$0xf] %v2349
        %2478 = vst [vmem:[%s379 + $0x74] sm:$0xf] %v2350
        %2479 = vst [vmem:[%s379 + $0x78] sm:$0xf] %v2351
        %2480 = vst [vmem:[%s379 + $0x7c] sm:$0xf] %v2352
        %2481 = vst [vmem:[%s379 + $0x80] sm:$0xf] %v2353
        %2482 = vst [vmem:[%s379 + $0x84] sm:$0xf] %v2354
        %2483 = vst [vmem:[%s379 + $0x88] sm:$0xf] %v2355
        %2484 = vst [vmem:[%s379 + $0x8c] sm:$0xf] %v2356
        %2485 = vst [vmem:[%s379 + $0x90] sm:$0xf] %v2357
        %2486 = vst [vmem:[%s379 + $0x94] sm:$0xf] %v2358
        %2487 = vst [vmem:[%s379 + $0x98] sm:$0xf] %v2359
        %2488 = vst [vmem:[%s379 + $0x9c] sm:$0xf] %v2360
        %2489 = vst [vmem:[%s379 + $0xa0] sm:$0xf] %v2361
        %2490 = vst [vmem:[%s379 + $0xa4] sm:$0xf] %v2362
        %2491 = vst [vmem:[%s379 + $0xa8] sm:$0xf] %v2363
        %2492 = vst [vmem:[%s379 + $0xac] sm:$0xf] %v2364
        %2493 = vst [vmem:[%s379 + $0xb0] sm:$0xf] %v2365
        %2494 = vst [vmem:[%s379 + $0xb4] sm:$0xf] %v2366
        %2495 = vst [vmem:[%s379 + $0xb8] sm:$0xf] %v2367
        %2496 = vst [vmem:[%s379 + $0xbc] sm:$0xf] %v2368
        %2497 = vst [vmem:[%s379 + $0xc0] sm:$0xf] %v2369
        %2498 = vst [vmem:[%s379 + $0xc4] sm:$0xf] %v2370
        %2499 = vst [vmem:[%s379 + $0xc8] sm:$0xf] %v2371
        %2500 = vst [vmem:[%s379 + $0xcc] sm:$0xf] %v2372
        %2501 = vst [vmem:[%s379 + $0xd0] sm:$0xf] %v2373
        %2502 = vst [vmem:[%s379 + $0xd4] sm:$0xf] %v2374
        %2503 = vst [vmem:[%s379 + $0xd8] sm:$0xf] %v2375
        %2504 = vst [vmem:[%s379 + $0xdc] sm:$0xf] %v2376
        %2505 = vst [vmem:[%s379 + $0xe0] sm:$0xf] %v2377
        %2506 = vst [vmem:[%s379 + $0xe4] sm:$0xf] %v2378
        %2507 = vst [vmem:[%s379 + $0xe8] sm:$0xf] %v2379
        %2508 = vst [vmem:[%s379 + $0xec] sm:$0xf] %v2380
        %2509 = vst [vmem:[%s379 + $0xf0] sm:$0xf] %v2381
        %2510 = vst [vmem:[%s379 + $0xf4] sm:$0xf] %v2382
        %2511 = vst [vmem:[%s379 + $0xf8] sm:$0xf] %v2383
        %2512 = vst [vmem:[%s379 + $0xfc] sm:$0xf] %v2384
        %s2513 = sand.u32 %s193, 1
        %s2514 = scalar_lea.sflag [#allocation4], %s2513
        %s2515 = sand.u32 %s193, 1
        %s2516 = smul.addr %s2515, 256
        %s2517 = scalar_lea.vmem [#allocation11], %s2516
        // Predicated region
        $region69: #{tpu_custom_call.1} parent=47 // pred_check
          %p2518 = pneg %p203
        $region70: #{tpu_custom_call.1} parent=47 // pred_check_branch
          %2520 = sbr.rel (%p2518) target = $region72
        $region71: #{tpu_custom_call.1} parent=47 // pred_region
          %s2521 = smul.u32 64, %s28
          %s2523 = ssub.s32 4096, 4096
          %2524 = vsyncadd %s2514, %s2523
          %s2525 = smul.addr %s2521, 64
          %s2526 = scalar_lea.hbm %s7, %s2525
          %s2527 = sshll.u32 %s2517, 4
          %s2528 = int_to_ptr.vmem [resolvable:$true] %s2527
          %2533 = dma.vmem_to_hbm [thread:$0]  %s2528, 4096, %s2526, %s2514, 64, 64, 4
        $region72: #{tpu_custom_call.1} parent=47 // pred_fallthru
          _
      $region48: #{tpu_custom_call.1} parent=5 // pred_fallthru
        _
      %p2534 = scmp.le.s32.totalorder 2, %s23
      // Predicated region
      $region73: #{tpu_custom_call.1} parent=5 // pred_check
        %p2535 = pneg %p2534
      $region74: #{tpu_custom_call.1} parent=5 // pred_check_branch
        %2537 = sbr.rel (%p2535) target = $region76
      $region75: #{tpu_custom_call.1} parent=5 // pred_region
        %s2538 = ssub.s32 %s23, 2
        // Predicated region
        $region77: #{tpu_custom_call.1} parent=75 // pred_check
          %p2539 = pneg %p209
        $region78: #{tpu_custom_call.1} parent=75 // pred_check_branch
          %2541 = sbr.rel (%p2539) target = $region80
        $region79: #{tpu_custom_call.1} parent=75 // pred_region
          %s2542 = sand.u32 %s194, 1
          %s2543 = scalar_lea.sflag [#allocation4], %s2542
          %s2544 = sand.u32 %s194, 1
          %s2545 = smul.addr %s2544, 256
          %s2546 = scalar_lea.vmem [#allocation11], %s2545
          %2547 = dma.done %s2543, 4096
        $region80: #{tpu_custom_call.1} parent=75 // pred_fallthru
          _
      $region76: #{tpu_custom_call.1} parent=5 // pred_fallthru
        _
    $region6: #{tpu_custom_call.1} parent=1 // loop_footer
      %s27 = sadd.s32 1, %s23
    $region7: #{tpu_custom_call.1} parent=1 // loop_footer_branch
      %22 = sbr.rel target = $region3
    $region8: #{tpu_custom_call.1} parent=1 // loop_exit
      _
    %2548 = vsyncpa [#allocation3], 1
    %s2549 = scalar_lea.sflag [#allocation3], 1
    %2550 = vsyncpa %s2549, 1
    %2551 = vsyncpa [#allocation6], 1
    %s2552 = scalar_lea.sflag [#allocation6], 1
    %2553 = vsyncpa %s2552, 1
    %2554 = vsyncpa [#allocation9], 1
    %2555 = vsyncpa [#allocation4], 1
    %s2556 = scalar_lea.sflag [#allocation4], 1
    %2557 = vsyncpa %s2556, 1

</llo_original>
